<compile_context>
chip_gen: v6e
topology: v6e:2x2x1
jax: 0.10.0
libtpu: 0.0.40
codegen_flags: <defaults>
</compile_context>

<pallas_src>
import math
import functools

import jax
import jax.numpy as jnp
import numpy as np
from jax import lax
from jax.experimental import pallas as pl
from jax.experimental.pallas import tpu as pltpu


def _layer_norm(x, gamma, beta, eps=1e-5):
    mu = jnp.mean(x, axis=-1, keepdims=True)
    var = jnp.mean((x - mu) ** 2, axis=-1, keepdims=True)
    xn = (x - mu) * lax.rsqrt(var + eps)
    return xn * gamma + beta


def one_layer_kernel(
    q_ref, k_ref, v_ref,              # (1, S, d_model) activations
    wq_ref, wk_ref, wv_ref, wo_ref,   # projection weights
    g1_ref, b1_ref,                   # attention LayerNorm gamma/beta, (1, d_model)
    w1_ref, w2_ref,                   # FFN weights
    g2_ref, b2_ref,                   # FFN LayerNorm gamma/beta, (1, d_model)
    out_ref, attn_ref,                # outputs: (1,S,d_model), (1,H,S,S)
    *, d_k, d_v, n_heads, compute_dtype,
):
    cdt = compute_dtype
    f32 = jnp.float32

    xq = q_ref[0].astype(cdt)          # (S, d_model)  (already cdt from wrapper)
    xk = k_ref[0].astype(cdt)
    xv_f32 = v_ref[0]                  # residual stays f32
    xv = xv_f32.astype(cdt)

    # QKV projections: one wide MXU matmul each, bf16 in / f32 accumulate.
    q = jnp.dot(xq, wq_ref[...].astype(cdt), preferred_element_type=f32)  # (S, H*d_k)
    k = jnp.dot(xk, wk_ref[...].astype(cdt), preferred_element_type=f32)  # (S, H*d_k)
    v = jnp.dot(xv, wv_ref[...].astype(cdt), preferred_element_type=f32)  # (S, H*d_v)

    # Fold the 1/sqrt(d_k) scale into Q once (instead of per score tile).
    q = (q * (1.0 / math.sqrt(d_k))).astype(cdt)
    k = k.astype(cdt)
    v = v.astype(cdt)

    # Contract last dims of Q and K directly — no explicit K transpose.
    dn_qkT = (((1,), (1,)), ((), ()))

    probs_heads = []
    attn_out = None                    # (S, d_model) f32 accumulator
    for h in range(n_heads):
        qh = q[:, h * d_k:(h + 1) * d_k]        # (S, d_k)
        kh = k[:, h * d_k:(h + 1) * d_k]        # (S, d_k)
        vh = v[:, h * d_v:(h + 1) * d_v]        # (S, d_v)

        s = lax.dot_general(qh, kh, dn_qkT, preferred_element_type=f32)   # (S, S)
        s = s - jnp.max(s, axis=-1, keepdims=True)
        e = jnp.exp(s)
        a = e * pl.reciprocal(jnp.sum(e, axis=-1, keepdims=True), approx=True)
        probs_heads.append(a)

        ctx_h = jnp.dot(a.astype(cdt), vh, preferred_element_type=f32)    # (S, d_v)
        # Fold the output projection into the head loop: no concatenate of
        # narrow per-head contexts, only one (S, d_model) accumulator live.
        wo_h = wo_ref[pl.ds(h * d_v, d_v), :].astype(cdt)                 # (d_v, d_model)
        part = jnp.dot(ctx_h.astype(cdt), wo_h, preferred_element_type=f32)
        attn_out = part if attn_out is None else attn_out + part

    # One contiguous (H, S, S) store of all attention probabilities.
    attn_ref[0] = jnp.stack(probs_heads, axis=0)

    # Residual (V input, per reference) + LayerNorm, in f32.
    x1 = _layer_norm(attn_out + xv_f32, g1_ref[...], b1_ref[...])

    # Position-wise FFN: Linear -> ReLU -> Linear, residual, LN.
    # TODO(synk): for transformer-scale d_ff, tile the FFN over d_ff chunks
    # (emit_pipeline over w1/w2 blocks) instead of holding them fully resident.
    hdn = jnp.maximum(
        jnp.dot(x1.astype(cdt), w1_ref[...].astype(cdt), preferred_element_type=f32), 0.0)
    ffn = jnp.dot(hdn.astype(cdt), w2_ref[...].astype(cdt), preferred_element_type=f32)
    x2 = _layer_norm(ffn + x1, g2_ref[...], b2_ref[...])

    out_ref[0] = x2.astype(out_ref.dtype)


def one_layer_forward(q_in, k_in, v_in, params, *, d_k, d_v, n_heads,
                      compute_dtype=jnp.bfloat16):
    B, S, d_model = v_in.shape
    cdt = compute_dtype

    # Cast matmul-only operands once on the host side of the call: halves the
    # HBM traffic for weights and Q/K activations.  V stays f32 (residual).
    q_c = q_in.astype(cdt)
    k_c = k_in.astype(cdt)
    wq = params["wq"].astype(cdt)
    wk = params["wk"].astype(cdt)
    wv = params["wv"].astype(cdt)
    wo = params["wo"].astype(cdt)
    w1 = params["w1"].astype(cdt)
    w2 = params["w2"].astype(cdt)

    kernel = functools.partial(one_layer_kernel, d_k=d_k, d_v=d_v,
                               n_heads=n_heads, compute_dtype=cdt)

    seq_spec = pl.BlockSpec((1, S, d_model), lambda b: (b, 0, 0))

    def full2d(arr):
        # Constant block index across the batch grid -> weight tile stays
        # resident in VMEM (no re-DMA per grid step).
        return pl.BlockSpec(arr.shape, lambda b: (0, 0))

    in_specs = [
        seq_spec, seq_spec, seq_spec,
        full2d(wq), full2d(wk), full2d(wv), full2d(wo),
        full2d(params["g1"]), full2d(params["b1"]),
        full2d(w1), full2d(w2),
        full2d(params["g2"]), full2d(params["b2"]),
    ]
    out_specs = [
        pl.BlockSpec((1, S, d_model), lambda b: (b, 0, 0)),
        pl.BlockSpec((1, n_heads, S, S), lambda b: (b, 0, 0, 0)),
    ]
    out_shape = [
        jax.ShapeDtypeStruct((B, S, d_model), jnp.float32),
        jax.ShapeDtypeStruct((B, n_heads, S, S), jnp.float32),
    ]

    # TODO(synk): for long sequences (v7x 64 MiB VMEM) add a query-tile grid
    # axis with a flash-style KV inner loop instead of whole-sequence blocks.
    return pl.pallas_call(
        kernel,
        out_shape=out_shape,
        grid_spec=pltpu.PrefetchScalarGridSpec(
            num_scalar_prefetch=0,
            grid=(B,),
            in_specs=in_specs,
            out_specs=out_specs,
        ),
        compiler_params=pltpu.CompilerParams(
            dimension_semantics=("parallel",),
            vmem_limit_bytes=48 * 1024 * 1024,
        ),
    )(
        q_c, k_c, v_in,
        wq, wk, wv, wo,
        params["g1"], params["b1"],
        w1, w2,
        params["g2"], params["b2"],
    )


def one_layer_reference(q_in, k_in, v_in, params, *, d_k, d_v, n_heads):
    """Pure-JAX f32 reference mirroring the PyTorch module."""
    B, S, d_model = v_in.shape
    q = (q_in @ params["wq"]).reshape(B, S, n_heads, d_k).transpose(0, 2, 1, 3)
    k = (k_in @ params["wk"]).reshape(B, S, n_heads, d_k).transpose(0, 2, 1, 3)
    v = (v_in @ params["wv"]).reshape(B, S, n_heads, d_v).transpose(0, 2, 1, 3)
    scores = jnp.einsum("bhqd,bhkd->bhqk", q, k) / math.sqrt(d_k)
    attn = jax.nn.softmax(scores, axis=-1)
    ctx = jnp.einsum("bhqk,bhkd->bhqd", attn, v)
    ctx = ctx.transpose(0, 2, 1, 3).reshape(B, S, n_heads * d_v)
    out = ctx @ params["wo"]
    x1 = _layer_norm(out + v_in, params["g1"][0], params["b1"][0])
    ffn = jnp.maximum(x1 @ params["w1"], 0.0) @ params["w2"]
    x2 = _layer_norm(ffn + x1, params["g2"][0], params["b2"][0])
    return x2, attn


def init_params(key, d_model, d_ff, d_k, d_v, n_heads):
    ks = jax.random.split(key, 6)
    scale = 0.1
    return {
        "wq": scale * jax.random.normal(ks[0], (d_model, d_k * n_heads), jnp.float32),
        "wk": scale * jax.random.normal(ks[1], (d_model, d_k * n_heads), jnp.float32),
        "wv": scale * jax.random.normal(ks[2], (d_model, d_v * n_heads), jnp.float32),
        "wo": scale * jax.random.normal(ks[3], (n_heads * d_v, d_model), jnp.float32),
        "g1": jnp.ones((1, d_model), jnp.float32),
        "b1": jnp.zeros((1, d_model), jnp.float32),
        "w1": scale * jax.random.normal(ks[4], (d_model, d_ff), jnp.float32),
        "w2": scale * jax.random.normal(ks[5], (d_ff, d_model), jnp.float32),
        "g2": jnp.ones((1, d_model), jnp.float32),
        "b2": jnp.zeros((1, d_model), jnp.float32),
    }


if __name__ == "__main__":
    B, S = 2, 8
    d_model, d_ff, d_k, d_v, n_heads = 32, 64, 16, 16, 4

    key = jax.random.PRNGKey(0)
    kq, kk, kv, kp = jax.random.split(key, 4)
    q_in = jax.random.normal(kq, (B, S, d_model), jnp.float32)
    k_in = jax.random.normal(kk, (B, S, d_model), jnp.float32)
    v_in = jax.random.normal(kv, (B, S, d_model), jnp.float32)
    params = init_params(kp, d_model, d_ff, d_k, d_v, n_heads)

    ref_out, ref_attn = one_layer_reference(
        q_in, k_in, v_in, params, d_k=d_k, d_v=d_v, n_heads=n_heads
    )

    # f32-compute mode: only the approximate softmax reciprocal differs from
    # the exact f32 reference -> moderately tight tolerance.
    out_f32, attn_f32 = one_layer_forward(
        q_in, k_in, v_in, params, d_k=d_k, d_v=d_v, n_heads=n_heads,
        compute_dtype=jnp.float32,
    )
    jax.block_until_ready((out_f32, attn_f32))
    np.testing.assert_allclose(np.asarray(out_f32), np.asarray(ref_out),
                               rtol=1e-2, atol=1e-2)
    np.testing.assert_allclose(np.asarray(attn_f32), np.asarray(ref_attn),
                               rtol=0.0, atol=1e-2)

    # bf16 MXU mode (default / performance configuration): looser tolerance.
    out_bf16, attn_bf16 = one_layer_forward(
        q_in, k_in, v_in, params, d_k=d_k, d_v=d_v, n_heads=n_heads,
        compute_dtype=jnp.bfloat16,
    )
    jax.block_until_ready((out_bf16, attn_bf16))
    np.testing.assert_allclose(np.asarray(out_bf16), np.asarray(ref_out),
                               rtol=5e-2, atol=5e-2)
    np.testing.assert_allclose(np.asarray(attn_bf16), np.asarray(ref_attn),
                               rtol=0.0, atol=2e-2)

    print("KERNEL_OK")
</pallas_src>

<mosaic_0001>
module attributes {stable_mosaic.version = 11 : i64} {
  func.func @one_layer_kernel(%arg0: i32, %arg1: memref<1x8x32xf32, #tpu.memory_space<vmem>>, %arg2: memref<1x8x32xf32, #tpu.memory_space<vmem>>, %arg3: memref<1x8x32xf32, #tpu.memory_space<vmem>>, %arg4: memref<32x64xf32, #tpu.memory_space<vmem>>, %arg5: memref<32x64xf32, #tpu.memory_space<vmem>>, %arg6: memref<32x64xf32, #tpu.memory_space<vmem>>, %arg7: memref<64x32xf32, #tpu.memory_space<vmem>>, %arg8: memref<1x32xf32, #tpu.memory_space<vmem>>, %arg9: memref<1x32xf32, #tpu.memory_space<vmem>>, %arg10: memref<32x64xf32, #tpu.memory_space<vmem>>, %arg11: memref<64x32xf32, #tpu.memory_space<vmem>>, %arg12: memref<1x32xf32, #tpu.memory_space<vmem>>, %arg13: memref<1x32xf32, #tpu.memory_space<vmem>>, %arg14: memref<1x8x32xf32, #tpu.memory_space<vmem>>, %arg15: memref<1x4x8x8xf32, #tpu.memory_space<vmem>>) attributes {dimension_semantics = [#tpu.dimension_semantics<parallel>], iteration_bounds = array<i64: 2>, scalar_prefetch = 0 : i64, scratch_operands = 0 : i64, tpu.core_type = #tpu.core_type<tc>, window_params = [{transform_indices = @transform_0, window_bounds = array<i64: 1, 8, 32>}, {transform_indices = @transform_1, window_bounds = array<i64: 1, 8, 32>}, {transform_indices = @transform_2, window_bounds = array<i64: 1, 8, 32>}, {pipeline_mode = #tpu.pipeline_mode<synchronous>, transform_indices = @transform_3, window_bounds = array<i64: 32, 64>}, {pipeline_mode = #tpu.pipeline_mode<synchronous>, transform_indices = @transform_4, window_bounds = array<i64: 32, 64>}, {pipeline_mode = #tpu.pipeline_mode<synchronous>, transform_indices = @transform_5, window_bounds = array<i64: 32, 64>}, {pipeline_mode = #tpu.pipeline_mode<synchronous>, transform_indices = @transform_6, window_bounds = array<i64: 64, 32>}, {pipeline_mode = #tpu.pipeline_mode<synchronous>, transform_indices = @transform_7, window_bounds = array<i64: 1, 32>}, {pipeline_mode = #tpu.pipeline_mode<synchronous>, transform_indices = @transform_8, window_bounds = array<i64: 1, 32>}, {pipeline_mode = #tpu.pipeline_mode<synchronous>, transform_indices = @transform_9, window_bounds = array<i64: 32, 64>}, {pipeline_mode = #tpu.pipeline_mode<synchronous>, transform_indices = @transform_10, window_bounds = array<i64: 64, 32>}, {pipeline_mode = #tpu.pipeline_mode<synchronous>, transform_indices = @transform_11, window_bounds = array<i64: 1, 32>}, {pipeline_mode = #tpu.pipeline_mode<synchronous>, transform_indices = @transform_12, window_bounds = array<i64: 1, 32>}, {transform_indices = @transform_13, window_bounds = array<i64: 1, 8, 32>}, {transform_indices = @transform_14, window_bounds = array<i64: 1, 4, 8, 8>}]} {
    %c0 = arith.constant 0 : index
    %c0_0 = arith.constant 0 : index
    %c0_1 = arith.constant 0 : index
    %0 = vector.load %arg1[%c0, %c0_0, %c0_1] : memref<1x8x32xf32, #tpu.memory_space<vmem>>, vector<1x8x32xf32>
    %1 = vector.shape_cast %0 : vector<1x8x32xf32> to vector<8x32xf32>
    %c0_2 = arith.constant 0 : index
    %c0_3 = arith.constant 0 : index
    %c0_4 = arith.constant 0 : index
    %2 = vector.load %arg2[%c0_2, %c0_3, %c0_4] : memref<1x8x32xf32, #tpu.memory_space<vmem>>, vector<1x8x32xf32>
    %3 = vector.shape_cast %2 : vector<1x8x32xf32> to vector<8x32xf32>
    %c0_5 = arith.constant 0 : index
    %c0_6 = arith.constant 0 : index
    %c0_7 = arith.constant 0 : index
    %4 = vector.load %arg3[%c0_5, %c0_6, %c0_7] : memref<1x8x32xf32, #tpu.memory_space<vmem>>, vector<1x8x32xf32>
    %5 = vector.shape_cast %4 : vector<1x8x32xf32> to vector<8x32xf32>
    %c0_8 = arith.constant 0 : index
    %c0_9 = arith.constant 0 : index
    %6 = vector.load %arg4[%c0_8, %c0_9] : memref<32x64xf32, #tpu.memory_space<vmem>>, vector<32x64xf32>
    %cst = arith.constant dense<0.000000e+00> : vector<8x64xf32>
    %7 = tpu.matmul %1, %6, %cst {dimension_numbers = #tpu.dot_dimension_numbers<[1], [0], [0], [1], [0, 0, 1, 1], [], []>} : vector<8x32xf32>, vector<32x64xf32>, vector<8x64xf32> -> vector<8x64xf32>
    %c0_10 = arith.constant 0 : index
    %c0_11 = arith.constant 0 : index
    %8 = vector.load %arg5[%c0_10, %c0_11] : memref<32x64xf32, #tpu.memory_space<vmem>>, vector<32x64xf32>
    %cst_12 = arith.constant dense<0.000000e+00> : vector<8x64xf32>
    %9 = tpu.matmul %3, %8, %cst_12 {dimension_numbers = #tpu.dot_dimension_numbers<[1], [0], [0], [1], [0, 0, 1, 1], [], []>} : vector<8x32xf32>, vector<32x64xf32>, vector<8x64xf32> -> vector<8x64xf32>
    %c0_13 = arith.constant 0 : index
    %c0_14 = arith.constant 0 : index
    %10 = vector.load %arg6[%c0_13, %c0_14] : memref<32x64xf32, #tpu.memory_space<vmem>>, vector<32x64xf32>
    %cst_15 = arith.constant dense<0.000000e+00> : vector<8x64xf32>
    %11 = tpu.matmul %5, %10, %cst_15 {dimension_numbers = #tpu.dot_dimension_numbers<[1], [0], [0], [1], [0, 0, 1, 1], [], []>} : vector<8x32xf32>, vector<32x64xf32>, vector<8x64xf32> -> vector<8x64xf32>
    %cst_16 = arith.constant 2.500000e-01 : f32
    %12 = vector.broadcast %cst_16 : f32 to vector<8x64xf32>
    %13 = arith.mulf %7, %12 : vector<8x64xf32>
    %14 = vector.extract_strided_slice %13 {offsets = [0, 0], sizes = [8, 16], strides = [1, 1]} : vector<8x64xf32> to vector<8x16xf32>
    %15 = vector.extract_strided_slice %9 {offsets = [0, 0], sizes = [8, 16], strides = [1, 1]} : vector<8x64xf32> to vector<8x16xf32>
    %16 = vector.extract_strided_slice %11 {offsets = [0, 0], sizes = [8, 16], strides = [1, 1]} : vector<8x64xf32> to vector<8x16xf32>
    %cst_17 = arith.constant dense<0.000000e+00> : vector<8x8xf32>
    %17 = tpu.matmul %14, %15, %cst_17 {dimension_numbers = #tpu.dot_dimension_numbers<[1], [1], [0], [0], [0, 0, 1, 0], [], []>} : vector<8x16xf32>, vector<8x16xf32>, vector<8x8xf32> -> vector<8x8xf32>
    %cst_18 = arith.constant dense<0xFF800000> : vector<8xf32>
    %18 = vector.multi_reduction <maximumf>, %17, %cst_18 [1] : vector<8x8xf32> to vector<8xf32>
    %19 = vector.shape_cast %18 : vector<8xf32> to vector<8x1xf32>
    %20 = vector.broadcast %19 : vector<8x1xf32> to vector<8x8xf32>
    %21 = arith.subf %17, %20 : vector<8x8xf32>
    %22 = math.exp %21 : vector<8x8xf32>
    %cst_19 = arith.constant dense<0.000000e+00> : vector<8xf32>
    %23 = vector.multi_reduction <add>, %22, %cst_19 [1] : vector<8x8xf32> to vector<8xf32>
    %24 = vector.shape_cast %23 : vector<8xf32> to vector<8x1xf32>
    %25 = tpu.reciprocal %24 {approx = true} : vector<8x1xf32> -> vector<8x1xf32>
    %26 = vector.broadcast %25 : vector<8x1xf32> to vector<8x8xf32>
    %27 = arith.mulf %22, %26 : vector<8x8xf32>
    %cst_20 = arith.constant dense<0.000000e+00> : vector<8x16xf32>
    %28 = tpu.matmul %27, %16, %cst_20 {dimension_numbers = #tpu.dot_dimension_numbers<[1], [0], [0], [1], [0, 0, 1, 1], [], []>} : vector<8x8xf32>, vector<8x16xf32>, vector<8x16xf32> -> vector<8x16xf32>
    %c0_21 = arith.constant 0 : index
    %c0_22 = arith.constant 0 : index
    %29 = vector.load %arg7[%c0_21, %c0_22] : memref<64x32xf32, #tpu.memory_space<vmem>>, vector<16x32xf32>
    %cst_23 = arith.constant dense<0.000000e+00> : vector<8x32xf32>
    %30 = tpu.matmul %28, %29, %cst_23 {dimension_numbers = #tpu.dot_dimension_numbers<[1], [0], [0], [1], [0, 0, 1, 1], [], []>} : vector<8x16xf32>, vector<16x32xf32>, vector<8x32xf32> -> vector<8x32xf32>
    %31 = vector.extract_strided_slice %13 {offsets = [0, 16], sizes = [8, 16], strides = [1, 1]} : vector<8x64xf32> to vector<8x16xf32>
    %32 = vector.extract_strided_slice %9 {offsets = [0, 16], sizes = [8, 16], strides = [1, 1]} : vector<8x64xf32> to vector<8x16xf32>
    %33 = vector.extract_strided_slice %11 {offsets = [0, 16], sizes = [8, 16], strides = [1, 1]} : vector<8x64xf32> to vector<8x16xf32>
    %cst_24 = arith.constant dense<0.000000e+00> : vector<8x8xf32>
    %34 = tpu.matmul %31, %32, %cst_24 {dimension_numbers = #tpu.dot_dimension_numbers<[1], [1], [0], [0], [0, 0, 1, 0], [], []>} : vector<8x16xf32>, vector<8x16xf32>, vector<8x8xf32> -> vector<8x8xf32>
    %cst_25 = arith.constant dense<0xFF800000> : vector<8xf32>
    %35 = vector.multi_reduction <maximumf>, %34, %cst_25 [1] : vector<8x8xf32> to vector<8xf32>
    %36 = vector.shape_cast %35 : vector<8xf32> to vector<8x1xf32>
    %37 = vector.broadcast %36 : vector<8x1xf32> to vector<8x8xf32>
    %38 = arith.subf %34, %37 : vector<8x8xf32>
    %39 = math.exp %38 : vector<8x8xf32>
    %cst_26 = arith.constant dense<0.000000e+00> : vector<8xf32>
    %40 = vector.multi_reduction <add>, %39, %cst_26 [1] : vector<8x8xf32> to vector<8xf32>
    %41 = vector.shape_cast %40 : vector<8xf32> to vector<8x1xf32>
    %42 = tpu.reciprocal %41 {approx = true} : vector<8x1xf32> -> vector<8x1xf32>
    %43 = vector.broadcast %42 : vector<8x1xf32> to vector<8x8xf32>
    %44 = arith.mulf %39, %43 : vector<8x8xf32>
    %cst_27 = arith.constant dense<0.000000e+00> : vector<8x16xf32>
    %45 = tpu.matmul %44, %33, %cst_27 {dimension_numbers = #tpu.dot_dimension_numbers<[1], [0], [0], [1], [0, 0, 1, 1], [], []>} : vector<8x8xf32>, vector<8x16xf32>, vector<8x16xf32> -> vector<8x16xf32>
    %c16 = arith.constant 16 : index
    %c0_28 = arith.constant 0 : index
    %46 = vector.load %arg7[%c16, %c0_28] : memref<64x32xf32, #tpu.memory_space<vmem>>, vector<16x32xf32>
    %cst_29 = arith.constant dense<0.000000e+00> : vector<8x32xf32>
    %47 = tpu.matmul %45, %46, %cst_29 {dimension_numbers = #tpu.dot_dimension_numbers<[1], [0], [0], [1], [0, 0, 1, 1], [], []>} : vector<8x16xf32>, vector<16x32xf32>, vector<8x32xf32> -> vector<8x32xf32>
    %48 = arith.addf %30, %47 : vector<8x32xf32>
    %49 = vector.extract_strided_slice %13 {offsets = [0, 32], sizes = [8, 16], strides = [1, 1]} : vector<8x64xf32> to vector<8x16xf32>
    %50 = vector.extract_strided_slice %9 {offsets = [0, 32], sizes = [8, 16], strides = [1, 1]} : vector<8x64xf32> to vector<8x16xf32>
    %51 = vector.extract_strided_slice %11 {offsets = [0, 32], sizes = [8, 16], strides = [1, 1]} : vector<8x64xf32> to vector<8x16xf32>
    %cst_30 = arith.constant dense<0.000000e+00> : vector<8x8xf32>
    %52 = tpu.matmul %49, %50, %cst_30 {dimension_numbers = #tpu.dot_dimension_numbers<[1], [1], [0], [0], [0, 0, 1, 0], [], []>} : vector<8x16xf32>, vector<8x16xf32>, vector<8x8xf32> -> vector<8x8xf32>
    %cst_31 = arith.constant dense<0xFF800000> : vector<8xf32>
    %53 = vector.multi_reduction <maximumf>, %52, %cst_31 [1] : vector<8x8xf32> to vector<8xf32>
    %54 = vector.shape_cast %53 : vector<8xf32> to vector<8x1xf32>
    %55 = vector.broadcast %54 : vector<8x1xf32> to vector<8x8xf32>
    %56 = arith.subf %52, %55 : vector<8x8xf32>
    %57 = math.exp %56 : vector<8x8xf32>
    %cst_32 = arith.constant dense<0.000000e+00> : vector<8xf32>
    %58 = vector.multi_reduction <add>, %57, %cst_32 [1] : vector<8x8xf32> to vector<8xf32>
    %59 = vector.shape_cast %58 : vector<8xf32> to vector<8x1xf32>
    %60 = tpu.reciprocal %59 {approx = true} : vector<8x1xf32> -> vector<8x1xf32>
    %61 = vector.broadcast %60 : vector<8x1xf32> to vector<8x8xf32>
    %62 = arith.mulf %57, %61 : vector<8x8xf32>
    %cst_33 = arith.constant dense<0.000000e+00> : vector<8x16xf32>
    %63 = tpu.matmul %62, %51, %cst_33 {dimension_numbers = #tpu.dot_dimension_numbers<[1], [0], [0], [1], [0, 0, 1, 1], [], []>} : vector<8x8xf32>, vector<8x16xf32>, vector<8x16xf32> -> vector<8x16xf32>
    %c32 = arith.constant 32 : index
    %c0_34 = arith.constant 0 : index
    %64 = vector.load %arg7[%c32, %c0_34] : memref<64x32xf32, #tpu.memory_space<vmem>>, vector<16x32xf32>
    %cst_35 = arith.constant dense<0.000000e+00> : vector<8x32xf32>
    %65 = tpu.matmul %63, %64, %cst_35 {dimension_numbers = #tpu.dot_dimension_numbers<[1], [0], [0], [1], [0, 0, 1, 1], [], []>} : vector<8x16xf32>, vector<16x32xf32>, vector<8x32xf32> -> vector<8x32xf32>
    %66 = arith.addf %48, %65 : vector<8x32xf32>
    %67 = vector.extract_strided_slice %13 {offsets = [0, 48], sizes = [8, 16], strides = [1, 1]} : vector<8x64xf32> to vector<8x16xf32>
    %68 = vector.extract_strided_slice %9 {offsets = [0, 48], sizes = [8, 16], strides = [1, 1]} : vector<8x64xf32> to vector<8x16xf32>
    %69 = vector.extract_strided_slice %11 {offsets = [0, 48], sizes = [8, 16], strides = [1, 1]} : vector<8x64xf32> to vector<8x16xf32>
    %cst_36 = arith.constant dense<0.000000e+00> : vector<8x8xf32>
    %70 = tpu.matmul %67, %68, %cst_36 {dimension_numbers = #tpu.dot_dimension_numbers<[1], [1], [0], [0], [0, 0, 1, 0], [], []>} : vector<8x16xf32>, vector<8x16xf32>, vector<8x8xf32> -> vector<8x8xf32>
    %cst_37 = arith.constant dense<0xFF800000> : vector<8xf32>
    %71 = vector.multi_reduction <maximumf>, %70, %cst_37 [1] : vector<8x8xf32> to vector<8xf32>
    %72 = vector.shape_cast %71 : vector<8xf32> to vector<8x1xf32>
    %73 = vector.broadcast %72 : vector<8x1xf32> to vector<8x8xf32>
    %74 = arith.subf %70, %73 : vector<8x8xf32>
    %75 = math.exp %74 : vector<8x8xf32>
    %cst_38 = arith.constant dense<0.000000e+00> : vector<8xf32>
    %76 = vector.multi_reduction <add>, %75, %cst_38 [1] : vector<8x8xf32> to vector<8xf32>
    %77 = vector.shape_cast %76 : vector<8xf32> to vector<8x1xf32>
    %78 = tpu.reciprocal %77 {approx = true} : vector<8x1xf32> -> vector<8x1xf32>
    %79 = vector.broadcast %78 : vector<8x1xf32> to vector<8x8xf32>
    %80 = arith.mulf %75, %79 : vector<8x8xf32>
    %cst_39 = arith.constant dense<0.000000e+00> : vector<8x16xf32>
    %81 = tpu.matmul %80, %69, %cst_39 {dimension_numbers = #tpu.dot_dimension_numbers<[1], [0], [0], [1], [0, 0, 1, 1], [], []>} : vector<8x8xf32>, vector<8x16xf32>, vector<8x16xf32> -> vector<8x16xf32>
    %c48 = arith.constant 48 : index
    %c0_40 = arith.constant 0 : index
    %82 = vector.load %arg7[%c48, %c0_40] : memref<64x32xf32, #tpu.memory_space<vmem>>, vector<16x32xf32>
    %cst_41 = arith.constant dense<0.000000e+00> : vector<8x32xf32>
    %83 = tpu.matmul %81, %82, %cst_41 {dimension_numbers = #tpu.dot_dimension_numbers<[1], [0], [0], [1], [0, 0, 1, 1], [], []>} : vector<8x16xf32>, vector<16x32xf32>, vector<8x32xf32> -> vector<8x32xf32>
    %84 = arith.addf %66, %83 : vector<8x32xf32>
    %85 = vector.shape_cast %27 : vector<8x8xf32> to vector<1x8x8xf32>
    %86 = vector.shape_cast %44 : vector<8x8xf32> to vector<1x8x8xf32>
    %87 = vector.shape_cast %62 : vector<8x8xf32> to vector<1x8x8xf32>
    %88 = vector.shape_cast %80 : vector<8x8xf32> to vector<1x8x8xf32>
    %89 = tpu.concatenate %85, %86, %87, %88 in 0 : vector<1x8x8xf32>, vector<1x8x8xf32>, vector<1x8x8xf32>, vector<1x8x8xf32> -> vector<4x8x8xf32>
    %c0_42 = arith.constant 0 : index
    %c0_43 = arith.constant 0 : index
    %c0_44 = arith.constant 0 : index
    %c0_45 = arith.constant 0 : index
    %90 = vector.load %arg15[%c0_42, %c0_43, %c0_44, %c0_45] : memref<1x4x8x8xf32, #tpu.memory_space<vmem>>, vector<1x4x8x8xf32>
    %91 = vector.shape_cast %90 : vector<1x4x8x8xf32> to vector<4x8x8xf32>
    %92 = vector.shape_cast %89 : vector<4x8x8xf32> to vector<1x4x8x8xf32>
    tpu.vector_store %arg15[%c0_42, %c0_43, %c0_44, %c0_45], %92 {strides = array<i32>} : memref<1x4x8x8xf32, #tpu.memory_space<vmem>>, vector<1x4x8x8xf32>,
    %93 = arith.addf %84, %5 : vector<8x32xf32>
    %c0_46 = arith.constant 0 : index
    %c0_47 = arith.constant 0 : index
    %94 = vector.load %arg8[%c0_46, %c0_47] : memref<1x32xf32, #tpu.memory_space<vmem>>, vector<1x32xf32>
    %c0_48 = arith.constant 0 : index
    %c0_49 = arith.constant 0 : index
    %95 = vector.load %arg9[%c0_48, %c0_49] : memref<1x32xf32, #tpu.memory_space<vmem>>, vector<1x32xf32>
    %cst_50 = arith.constant dense<0.000000e+00> : vector<8xf32>
    %96 = vector.multi_reduction <add>, %93, %cst_50 [1] : vector<8x32xf32> to vector<8xf32>
    %97 = vector.shape_cast %96 : vector<8xf32> to vector<8x1xf32>
    %cst_51 = arith.constant 3.200000e+01 : f32
    %98 = vector.broadcast %cst_51 : f32 to vector<8x1xf32>
    %99 = arith.divf %97, %98 : vector<8x1xf32>
    %100 = vector.broadcast %99 : vector<8x1xf32> to vector<8x32xf32>
    %101 = arith.subf %93, %100 : vector<8x32xf32>
    %102 = arith.mulf %101, %101 : vector<8x32xf32>
    %cst_52 = arith.constant dense<0.000000e+00> : vector<8xf32>
    %103 = vector.multi_reduction <add>, %102, %cst_52 [1] : vector<8x32xf32> to vector<8xf32>
    %104 = vector.shape_cast %103 : vector<8xf32> to vector<8x1xf32>
    %cst_53 = arith.constant 3.200000e+01 : f32
    %105 = vector.broadcast %cst_53 : f32 to vector<8x1xf32>
    %106 = arith.divf %104, %105 : vector<8x1xf32>
    %107 = vector.broadcast %99 : vector<8x1xf32> to vector<8x32xf32>
    %108 = arith.subf %93, %107 : vector<8x32xf32>
    %cst_54 = arith.constant 9.99999974E-6 : f32
    %109 = vector.broadcast %cst_54 : f32 to vector<8x1xf32>
    %110 = arith.addf %106, %109 : vector<8x1xf32>
    %111 = math.rsqrt %110 : vector<8x1xf32>
    %112 = vector.broadcast %111 : vector<8x1xf32> to vector<8x32xf32>
    %113 = arith.mulf %108, %112 : vector<8x32xf32>
    %114 = vector.broadcast %94 : vector<1x32xf32> to vector<8x32xf32>
    %115 = arith.mulf %113, %114 : vector<8x32xf32>
    %116 = vector.broadcast %95 : vector<1x32xf32> to vector<8x32xf32>
    %117 = arith.addf %115, %116 : vector<8x32xf32>
    %c0_55 = arith.constant 0 : index
    %c0_56 = arith.constant 0 : index
    %118 = vector.load %arg10[%c0_55, %c0_56] : memref<32x64xf32, #tpu.memory_space<vmem>>, vector<32x64xf32>
    %cst_57 = arith.constant dense<0.000000e+00> : vector<8x64xf32>
    %119 = tpu.matmul %117, %118, %cst_57 {dimension_numbers = #tpu.dot_dimension_numbers<[1], [0], [0], [1], [0, 0, 1, 1], [], []>} : vector<8x32xf32>, vector<32x64xf32>, vector<8x64xf32> -> vector<8x64xf32>
    %cst_58 = arith.constant 0.000000e+00 : f32
    %120 = vector.broadcast %cst_58 : f32 to vector<8x64xf32>
    %121 = arith.maximumf %119, %120 : vector<8x64xf32>
    %c0_59 = arith.constant 0 : index
    %c0_60 = arith.constant 0 : index
    %122 = vector.load %arg11[%c0_59, %c0_60] : memref<64x32xf32, #tpu.memory_space<vmem>>, vector<64x32xf32>
    %cst_61 = arith.constant dense<0.000000e+00> : vector<8x32xf32>
    %123 = tpu.matmul %121, %122, %cst_61 {dimension_numbers = #tpu.dot_dimension_numbers<[1], [0], [0], [1], [0, 0, 1, 1], [], []>} : vector<8x64xf32>, vector<64x32xf32>, vector<8x32xf32> -> vector<8x32xf32>
    %124 = arith.addf %123, %117 : vector<8x32xf32>
    %c0_62 = arith.constant 0 : index
    %c0_63 = arith.constant 0 : index
    %125 = vector.load %arg12[%c0_62, %c0_63] : memref<1x32xf32, #tpu.memory_space<vmem>>, vector<1x32xf32>
    %c0_64 = arith.constant 0 : index
    %c0_65 = arith.constant 0 : index
    %126 = vector.load %arg13[%c0_64, %c0_65] : memref<1x32xf32, #tpu.memory_space<vmem>>, vector<1x32xf32>
    %cst_66 = arith.constant dense<0.000000e+00> : vector<8xf32>
    %127 = vector.multi_reduction <add>, %124, %cst_66 [1] : vector<8x32xf32> to vector<8xf32>
    %128 = vector.shape_cast %127 : vector<8xf32> to vector<8x1xf32>
    %cst_67 = arith.constant 3.200000e+01 : f32
    %129 = vector.broadcast %cst_67 : f32 to vector<8x1xf32>
    %130 = arith.divf %128, %129 : vector<8x1xf32>
    %131 = vector.broadcast %130 : vector<8x1xf32> to vector<8x32xf32>
    %132 = arith.subf %124, %131 : vector<8x32xf32>
    %133 = arith.mulf %132, %132 : vector<8x32xf32>
    %cst_68 = arith.constant dense<0.000000e+00> : vector<8xf32>
    %134 = vector.multi_reduction <add>, %133, %cst_68 [1] : vector<8x32xf32> to vector<8xf32>
    %135 = vector.shape_cast %134 : vector<8xf32> to vector<8x1xf32>
    %cst_69 = arith.constant 3.200000e+01 : f32
    %136 = vector.broadcast %cst_69 : f32 to vector<8x1xf32>
    %137 = arith.divf %135, %136 : vector<8x1xf32>
    %138 = vector.broadcast %130 : vector<8x1xf32> to vector<8x32xf32>
    %139 = arith.subf %124, %138 : vector<8x32xf32>
    %cst_70 = arith.constant 9.99999974E-6 : f32
    %140 = vector.broadcast %cst_70 : f32 to vector<8x1xf32>
    %141 = arith.addf %137, %140 : vector<8x1xf32>
    %142 = math.rsqrt %141 : vector<8x1xf32>
    %143 = vector.broadcast %142 : vector<8x1xf32> to vector<8x32xf32>
    %144 = arith.mulf %139, %143 : vector<8x32xf32>
    %145 = vector.broadcast %125 : vector<1x32xf32> to vector<8x32xf32>
    %146 = arith.mulf %144, %145 : vector<8x32xf32>
    %147 = vector.broadcast %126 : vector<1x32xf32> to vector<8x32xf32>
    %148 = arith.addf %146, %147 : vector<8x32xf32>
    %c0_71 = arith.constant 0 : index
    %c0_72 = arith.constant 0 : index
    %c0_73 = arith.constant 0 : index
    %149 = vector.load %arg14[%c0_71, %c0_72, %c0_73] : memref<1x8x32xf32, #tpu.memory_space<vmem>>, vector<1x8x32xf32>
    %150 = vector.shape_cast %149 : vector<1x8x32xf32> to vector<8x32xf32>
    %151 = vector.shape_cast %148 : vector<8x32xf32> to vector<1x8x32xf32>
    tpu.vector_store %arg14[%c0_71, %c0_72, %c0_73], %151 {strides = array<i32>} : memref<1x8x32xf32, #tpu.memory_space<vmem>>, vector<1x8x32xf32>,
    return
  }
  func.func @transform_0(%arg0: i32) -> (i32, i32, i32) {
    %c0_i32 = arith.constant 0 : i32
    %c0_i32_0 = arith.constant 0 : i32
    %c0_i32_1 = arith.constant 0 : i32
    return %arg0, %c0_i32, %c0_i32_0 : i32, i32, i32
  }
  func.func @transform_1(%arg0: i32) -> (i32, i32, i32) {
    %c0_i32 = arith.constant 0 : i32
    %c0_i32_0 = arith.constant 0 : i32
    %c0_i32_1 = arith.constant 0 : i32
    return %arg0, %c0_i32, %c0_i32_0 : i32, i32, i32
  }
  func.func @transform_2(%arg0: i32) -> (i32, i32, i32) {
    %c0_i32 = arith.constant 0 : i32
    %c0_i32_0 = arith.constant 0 : i32
    %c0_i32_1 = arith.constant 0 : i32
    return %arg0, %c0_i32, %c0_i32_0 : i32, i32, i32
  }
  func.func @transform_3(%arg0: i32) -> (i32, i32) {
    %c0_i32 = arith.constant 0 : i32
    %c0_i32_0 = arith.constant 0 : i32
    %c0_i32_1 = arith.constant 0 : i32
    return %c0_i32, %c0_i32_0 : i32, i32
  }
  func.func @transform_4(%arg0: i32) -> (i32, i32) {
    %c0_i32 = arith.constant 0 : i32
    %c0_i32_0 = arith.constant 0 : i32
    %c0_i32_1 = arith.constant 0 : i32
    return %c0_i32, %c0_i32_0 : i32, i32
  }
  func.func @transform_5(%arg0: i32) -> (i32, i32) {
    %c0_i32 = arith.constant 0 : i32
    %c0_i32_0 = arith.constant 0 : i32
    %c0_i32_1 = arith.constant 0 : i32
    return %c0_i32, %c0_i32_0 : i32, i32
  }
  func.func @transform_6(%arg0: i32) -> (i32, i32) {
    %c0_i32 = arith.constant 0 : i32
    %c0_i32_0 = arith.constant 0 : i32
    %c0_i32_1 = arith.constant 0 : i32
    return %c0_i32, %c0_i32_0 : i32, i32
  }
  func.func @transform_7(%arg0: i32) -> (i32, i32) {
    %c0_i32 = arith.constant 0 : i32
    %c0_i32_0 = arith.constant 0 : i32
    %c0_i32_1 = arith.constant 0 : i32
    return %c0_i32, %c0_i32_0 : i32, i32
  }
  func.func @transform_8(%arg0: i32) -> (i32, i32) {
    %c0_i32 = arith.constant 0 : i32
    %c0_i32_0 = arith.constant 0 : i32
    %c0_i32_1 = arith.constant 0 : i32
    return %c0_i32, %c0_i32_0 : i32, i32
  }
  func.func @transform_9(%arg0: i32) -> (i32, i32) {
    %c0_i32 = arith.constant 0 : i32
    %c0_i32_0 = arith.constant 0 : i32
    %c0_i32_1 = arith.constant 0 : i32
    return %c0_i32, %c0_i32_0 : i32, i32
  }
  func.func @transform_10(%arg0: i32) -> (i32, i32) {
    %c0_i32 = arith.constant 0 : i32
    %c0_i32_0 = arith.constant 0 : i32
    %c0_i32_1 = arith.constant 0 : i32
    return %c0_i32, %c0_i32_0 : i32, i32
  }
  func.func @transform_11(%arg0: i32) -> (i32, i32) {
    %c0_i32 = arith.constant 0 : i32
    %c0_i32_0 = arith.constant 0 : i32
    %c0_i32_1 = arith.constant 0 : i32
    return %c0_i32, %c0_i32_0 : i32, i32
  }
  func.func @transform_12(%arg0: i32) -> (i32, i32) {
    %c0_i32 = arith.constant 0 : i32
    %c0_i32_0 = arith.constant 0 : i32
    %c0_i32_1 = arith.constant 0 : i32
    return %c0_i32, %c0_i32_0 : i32, i32
  }
  func.func @transform_13(%arg0: i32) -> (i32, i32, i32) {
    %c0_i32 = arith.constant 0 : i32
    %c0_i32_0 = arith.constant 0 : i32
    %c0_i32_1 = arith.constant 0 : i32
    return %arg0, %c0_i32, %c0_i32_0 : i32, i32, i32
  }
  func.func @transform_14(%arg0: i32) -> (i32, i32, i32, i32) {
    %c0_i32 = arith.constant 0 : i32
    %c0_i32_0 = arith.constant 0 : i32
    %c0_i32_1 = arith.constant 0 : i32
    %c0_i32_2 = arith.constant 0 : i32
    return %arg0, %c0_i32, %c0_i32_0, %c0_i32_1 : i32, i32, i32, i32
  }
}

</mosaic_0001>

<llo_original>
// kernel: tpu_custom_call.1
$region0: #{tpu_custom_call.1}
  #allocation0 [shape = 'u32[]', space=smem, size = 0x4, offset = 0x4, fixed_abs, tag = 'smem constant byte address 0x4 - core index']
  #allocation1 [shape = 'u32[144,128]{1,0:T(1,128)}', space=vmem, size = 0x12000, scoped, tag = 'internal scratch']
  %s0 = inlined_call_operand.vmem [shape: f32[2,8,32], index: 0, kind: input, shape index: {}]
  %s1 = inlined_call_operand.vmem [shape: f32[2,8,32], index: 1, kind: input, shape index: {}]
  %s2 = inlined_call_operand.hbm [shape: f32[2,8,32], index: 2, kind: input, shape index: {}]
  %s3 = inlined_call_operand.vmem [shape: f32[32,64], index: 3, kind: input, shape index: {}]
  %s4 = inlined_call_operand.vmem [shape: f32[32,64], index: 4, kind: input, shape index: {}]
  %s5 = inlined_call_operand.vmem [shape: f32[32,64], index: 5, kind: input, shape index: {}]
  %s6 = inlined_call_operand.vmem [shape: f32[64,32], index: 6, kind: input, shape index: {}]
  %s7 = inlined_call_operand.vmem [shape: f32[1,32], index: 7, kind: input, shape index: {}]
  %s8 = inlined_call_operand.vmem [shape: f32[1,32], index: 8, kind: input, shape index: {}]
  %s9 = inlined_call_operand.vmem [shape: f32[32,64], index: 9, kind: input, shape index: {}]
  %s10 = inlined_call_operand.vmem [shape: f32[64,32], index: 10, kind: input, shape index: {}]
  %s11 = inlined_call_operand.vmem [shape: f32[1,32], index: 11, kind: input, shape index: {}]
  %s12 = inlined_call_operand.vmem [shape: f32[1,32], index: 12, kind: input, shape index: {}]
  %s13 = inlined_call_operand.hbm [shape: f32[2,8,32], index: 13, kind: output, shape index: {0}]
  %s14 = inlined_call_operand.hbm [shape: f32[2,4,8,8], index: 14, kind: output, shape index: {1}]
  %15 = xla_tuple %s13, %s14
  %s16 = sld [smem:[#allocation0]]
  $region97: #{tpu_custom_call.1} parent=0
    _
  %s18 = ssub.s32 1, %s16
  %s19 = scalar_select 0, %s18, %s16
  $region1: #{tpu_custom_call.1} parent=0
    #allocation2 [shape = 'u8[8192]{0}', space=vmem, size = 0x2000, scoped, tag = 'input window, operand 2']
    #allocation3 [shape = 's32[2]{0}', space=sflag, size = 0x8, scoped, tag = 'scoped memory for tpu_custom_call.1']
    #allocation4 [shape = 's32[2]{0}', space=sflag, size = 0x8, scoped, tag = 'scoped memory for tpu_custom_call.1']
    #allocation5 [shape = 'u8[8192]{0}', space=vmem, size = 0x2000, scoped, tag = 'output window, operand 0']
    #allocation6 [shape = 'u8[32768]{0}', space=vmem, size = 0x8000, scoped, tag = 'output window, operand 1']
    #allocation7 [shape = 's32[2]{0}', space=sflag, size = 0x8, scoped, tag = 'scoped memory for tpu_custom_call.1']
    %20 = vsyncpa [#allocation3], 0
    %s21 = scalar_lea.sflag [#allocation3], 1
    %22 = vsyncpa %s21, 0
    %23 = vsyncpa [#allocation4], 0
    %s24 = scalar_lea.sflag [#allocation4], 1
    %25 = vsyncpa %s24, 0
    %26 = vsyncpa [#allocation7], 0
    %s27 = scalar_lea.sflag [#allocation7], 1
    %28 = vsyncpa %s27, 0
    loop: start=0, step=1, limit=4
    $region2: #{tpu_custom_call.1} parent=1 // loop_pre_header
      _
    $region3: #{tpu_custom_call.1} parent=1 // loop_header
      %s30 = sphi 0, %s34
      %p31 = scmp.ge.s32.totalorder %s30, 4
      %s40 = sphi 0, %s42
      %s43 = sphi 0, %s40
      %s44 = sphi 0, %s43
      %s60 = sphi 0, %s44
      %s66 = sphi 0, %s68
      %s69 = sphi 0, %s66
      %s70 = sphi 0, %s69
      %s86 = sphi 0, %s70
      %s92 = sphi 0, %s94
      %s95 = sphi 0, %s92
      %s96 = sphi 0, %s95
      %s112 = sphi 0, %s96
      %s116 = sphi 0, %s116
      %s118 = sphi 0, %s116
      %s119 = sphi 0, %s118
      %s133 = sphi 0, %s119
      %s137 = sphi 0, %s137
      %s139 = sphi 0, %s137
      %s140 = sphi 0, %s139
      %s154 = sphi 0, %s140
      %s158 = sphi 0, %s158
      %s160 = sphi 0, %s158
      %s161 = sphi 0, %s160
      %s175 = sphi 0, %s161
      %s179 = sphi 0, %s179
      %s181 = sphi 0, %s179
      %s182 = sphi 0, %s181
      %s196 = sphi 0, %s182
      %s200 = sphi 0, %s200
      %s202 = sphi 0, %s200
      %s203 = sphi 0, %s202
      %s217 = sphi 0, %s203
      %s221 = sphi 0, %s221
      %s223 = sphi 0, %s221
      %s224 = sphi 0, %s223
      %s238 = sphi 0, %s224
      %s242 = sphi 0, %s242
      %s244 = sphi 0, %s242
      %s245 = sphi 0, %s244
      %s259 = sphi 0, %s245
      %s263 = sphi 0, %s263
      %s265 = sphi 0, %s263
      %s266 = sphi 0, %s265
      %s280 = sphi 0, %s266
      %s284 = sphi 0, %s284
      %s286 = sphi 0, %s284
      %s287 = sphi 0, %s286
      %s301 = sphi 0, %s287
      %s305 = sphi 0, %s305
      %s307 = sphi 0, %s305
      %s308 = sphi 0, %s307
      %s322 = sphi 0, %s308
      %s328 = sphi 0, %s330
      %s331 = sphi 0, %s328
      %s332 = sphi 0, %s331
      %s348 = sphi 0, %s332
      %s354 = sphi 0, %s356
      %s357 = sphi 0, %s354
      %s358 = sphi 0, %s357
      %s374 = sphi 0, %s358
    $region4: #{tpu_custom_call.1} parent=1 // loop_header_branch
      %33 = sbr.rel (%p31) target = $region8
    $region5: #{tpu_custom_call.1} parent=1 // loop_body
      %s35 = ssub.s32 %s30, 1
      %s36 = ssub.s32 %s30, 2
      %s37 = sadd.s32 %s30, 1
      %s38 = ssub.s32 %s30, %s37
      %p39 = scmp.eq.s32.totalorder %s38, 0
      %s41 = sadd.s32 %s40, 1
      %s42 = scalar_select %p39, %s40, %s41
      %p45 = pneg %p39
      %p46 = scmp.eq.s32.totalorder %s30, 1
      %p47 = por %p45, %p46
      %p48 = scmp.ne.s32.totalorder %s40, %s43
      %p49 = scmp.eq.s32.totalorder %s30, 0
      %p50 = por %p48, %p49
      %p51 = scmp.ne.s32.totalorder %s40, %s43
      %p52 = scmp.eq.s32.totalorder %s35, 1
      %p53 = por %p51, %p52
      %p54 = scmp.ne.s32.totalorder %s43, %s44
      %p55 = scmp.eq.s32.totalorder %s35, 0
      %p56 = por %p54, %p55
      %p57 = scmp.ne.s32.totalorder %s43, %s44
      %p58 = scmp.eq.s32.totalorder %s36, 1
      %p59 = por %p57, %p58
      %p61 = scmp.ne.s32.totalorder %s44, %s60
      %p62 = scmp.eq.s32.totalorder %s36, 0
      %p63 = por %p61, %p62
      %s64 = ssub.s32 %s30, %s37
      %p65 = scmp.eq.s32.totalorder %s64, 0
      %s67 = sadd.s32 %s66, 1
      %s68 = scalar_select %p65, %s66, %s67
      %p71 = pneg %p65
      %p72 = scmp.eq.s32.totalorder %s30, 1
      %p73 = por %p71, %p72
      %p74 = scmp.ne.s32.totalorder %s66, %s69
      %p75 = scmp.eq.s32.totalorder %s30, 0
      %p76 = por %p74, %p75
      %p77 = scmp.ne.s32.totalorder %s66, %s69
      %p78 = scmp.eq.s32.totalorder %s35, 1
      %p79 = por %p77, %p78
      %p80 = scmp.ne.s32.totalorder %s69, %s70
      %p81 = scmp.eq.s32.totalorder %s35, 0
      %p82 = por %p80, %p81
      %p83 = scmp.ne.s32.totalorder %s69, %s70
      %p84 = scmp.eq.s32.totalorder %s36, 1
      %p85 = por %p83, %p84
      %p87 = scmp.ne.s32.totalorder %s70, %s86
      %p88 = scmp.eq.s32.totalorder %s36, 0
      %p89 = por %p87, %p88
      %s90 = ssub.s32 %s30, %s37
      %p91 = scmp.eq.s32.totalorder %s90, 0
      %s93 = sadd.s32 %s92, 1
      %s94 = scalar_select %p91, %s92, %s93
      %p97 = pneg %p91
      %p98 = scmp.eq.s32.totalorder %s30, 1
      %p99 = por %p97, %p98
      %p100 = scmp.ne.s32.totalorder %s92, %s95
      %p101 = scmp.eq.s32.totalorder %s30, 0
      %p102 = por %p100, %p101
      %p103 = scmp.ne.s32.totalorder %s92, %s95
      %p104 = scmp.eq.s32.totalorder %s35, 1
      %p105 = por %p103, %p104
      %p106 = scmp.ne.s32.totalorder %s95, %s96
      %p107 = scmp.eq.s32.totalorder %s35, 0
      %p108 = por %p106, %p107
      %p109 = scmp.ne.s32.totalorder %s95, %s96
      %p110 = scmp.eq.s32.totalorder %s36, 1
      %p111 = por %p109, %p110
      %p113 = scmp.ne.s32.totalorder %s96, %s112
      %p114 = scmp.eq.s32.totalorder %s36, 0
      %p115 = por %p113, %p114
      %s117 = sadd.s32 %s116, 1
      %p120 = scmp.eq.s32.totalorder %s30, 1
      %p121 = scmp.ne.s32.totalorder %s116, %s118
      %p122 = scmp.eq.s32.totalorder %s30, 0
      %p123 = por %p121, %p122
      %p124 = scmp.ne.s32.totalorder %s116, %s118
      %p125 = scmp.eq.s32.totalorder %s35, 1
      %p126 = por %p124, %p125
      %p127 = scmp.ne.s32.totalorder %s118, %s119
      %p128 = scmp.eq.s32.totalorder %s35, 0
      %p129 = por %p127, %p128
      %p130 = scmp.ne.s32.totalorder %s118, %s119
      %p131 = scmp.eq.s32.totalorder %s36, 1
      %p132 = por %p130, %p131
      %p134 = scmp.ne.s32.totalorder %s119, %s133
      %p135 = scmp.eq.s32.totalorder %s36, 0
      %p136 = por %p134, %p135
      %s138 = sadd.s32 %s137, 1
      %p141 = scmp.eq.s32.totalorder %s30, 1
      %p142 = scmp.ne.s32.totalorder %s137, %s139
      %p143 = scmp.eq.s32.totalorder %s30, 0
      %p144 = por %p142, %p143
      %p145 = scmp.ne.s32.totalorder %s137, %s139
      %p146 = scmp.eq.s32.totalorder %s35, 1
      %p147 = por %p145, %p146
      %p148 = scmp.ne.s32.totalorder %s139, %s140
      %p149 = scmp.eq.s32.totalorder %s35, 0
      %p150 = por %p148, %p149
      %p151 = scmp.ne.s32.totalorder %s139, %s140
      %p152 = scmp.eq.s32.totalorder %s36, 1
      %p153 = por %p151, %p152
      %p155 = scmp.ne.s32.totalorder %s140, %s154
      %p156 = scmp.eq.s32.totalorder %s36, 0
      %p157 = por %p155, %p156
      %s159 = sadd.s32 %s158, 1
      %p162 = scmp.eq.s32.totalorder %s30, 1
      %p163 = scmp.ne.s32.totalorder %s158, %s160
      %p164 = scmp.eq.s32.totalorder %s30, 0
      %p165 = por %p163, %p164
      %p166 = scmp.ne.s32.totalorder %s158, %s160
      %p167 = scmp.eq.s32.totalorder %s35, 1
      %p168 = por %p166, %p167
      %p169 = scmp.ne.s32.totalorder %s160, %s161
      %p170 = scmp.eq.s32.totalorder %s35, 0
      %p171 = por %p169, %p170
      %p172 = scmp.ne.s32.totalorder %s160, %s161
      %p173 = scmp.eq.s32.totalorder %s36, 1
      %p174 = por %p172, %p173
      %p176 = scmp.ne.s32.totalorder %s161, %s175
      %p177 = scmp.eq.s32.totalorder %s36, 0
      %p178 = por %p176, %p177
      %s180 = sadd.s32 %s179, 1
      %p183 = scmp.eq.s32.totalorder %s30, 1
      %p184 = scmp.ne.s32.totalorder %s179, %s181
      %p185 = scmp.eq.s32.totalorder %s30, 0
      %p186 = por %p184, %p185
      %p187 = scmp.ne.s32.totalorder %s179, %s181
      %p188 = scmp.eq.s32.totalorder %s35, 1
      %p189 = por %p187, %p188
      %p190 = scmp.ne.s32.totalorder %s181, %s182
      %p191 = scmp.eq.s32.totalorder %s35, 0
      %p192 = por %p190, %p191
      %p193 = scmp.ne.s32.totalorder %s181, %s182
      %p194 = scmp.eq.s32.totalorder %s36, 1
      %p195 = por %p193, %p194
      %p197 = scmp.ne.s32.totalorder %s182, %s196
      %p198 = scmp.eq.s32.totalorder %s36, 0
      %p199 = por %p197, %p198
      %s201 = sadd.s32 %s200, 1
      %p204 = scmp.eq.s32.totalorder %s30, 1
      %p205 = scmp.ne.s32.totalorder %s200, %s202
      %p206 = scmp.eq.s32.totalorder %s30, 0
      %p207 = por %p205, %p206
      %p208 = scmp.ne.s32.totalorder %s200, %s202
      %p209 = scmp.eq.s32.totalorder %s35, 1
      %p210 = por %p208, %p209
      %p211 = scmp.ne.s32.totalorder %s202, %s203
      %p212 = scmp.eq.s32.totalorder %s35, 0
      %p213 = por %p211, %p212
      %p214 = scmp.ne.s32.totalorder %s202, %s203
      %p215 = scmp.eq.s32.totalorder %s36, 1
      %p216 = por %p214, %p215
      %p218 = scmp.ne.s32.totalorder %s203, %s217
      %p219 = scmp.eq.s32.totalorder %s36, 0
      %p220 = por %p218, %p219
      %s222 = sadd.s32 %s221, 1
      %p225 = scmp.eq.s32.totalorder %s30, 1
      %p226 = scmp.ne.s32.totalorder %s221, %s223
      %p227 = scmp.eq.s32.totalorder %s30, 0
      %p228 = por %p226, %p227
      %p229 = scmp.ne.s32.totalorder %s221, %s223
      %p230 = scmp.eq.s32.totalorder %s35, 1
      %p231 = por %p229, %p230
      %p232 = scmp.ne.s32.totalorder %s223, %s224
      %p233 = scmp.eq.s32.totalorder %s35, 0
      %p234 = por %p232, %p233
      %p235 = scmp.ne.s32.totalorder %s223, %s224
      %p236 = scmp.eq.s32.totalorder %s36, 1
      %p237 = por %p235, %p236
      %p239 = scmp.ne.s32.totalorder %s224, %s238
      %p240 = scmp.eq.s32.totalorder %s36, 0
      %p241 = por %p239, %p240
      %s243 = sadd.s32 %s242, 1
      %p246 = scmp.eq.s32.totalorder %s30, 1
      %p247 = scmp.ne.s32.totalorder %s242, %s244
      %p248 = scmp.eq.s32.totalorder %s30, 0
      %p249 = por %p247, %p248
      %p250 = scmp.ne.s32.totalorder %s242, %s244
      %p251 = scmp.eq.s32.totalorder %s35, 1
      %p252 = por %p250, %p251
      %p253 = scmp.ne.s32.totalorder %s244, %s245
      %p254 = scmp.eq.s32.totalorder %s35, 0
      %p255 = por %p253, %p254
      %p256 = scmp.ne.s32.totalorder %s244, %s245
      %p257 = scmp.eq.s32.totalorder %s36, 1
      %p258 = por %p256, %p257
      %p260 = scmp.ne.s32.totalorder %s245, %s259
      %p261 = scmp.eq.s32.totalorder %s36, 0
      %p262 = por %p260, %p261
      %s264 = sadd.s32 %s263, 1
      %p267 = scmp.eq.s32.totalorder %s30, 1
      %p268 = scmp.ne.s32.totalorder %s263, %s265
      %p269 = scmp.eq.s32.totalorder %s30, 0
      %p270 = por %p268, %p269
      %p271 = scmp.ne.s32.totalorder %s263, %s265
      %p272 = scmp.eq.s32.totalorder %s35, 1
      %p273 = por %p271, %p272
      %p274 = scmp.ne.s32.totalorder %s265, %s266
      %p275 = scmp.eq.s32.totalorder %s35, 0
      %p276 = por %p274, %p275
      %p277 = scmp.ne.s32.totalorder %s265, %s266
      %p278 = scmp.eq.s32.totalorder %s36, 1
      %p279 = por %p277, %p278
      %p281 = scmp.ne.s32.totalorder %s266, %s280
      %p282 = scmp.eq.s32.totalorder %s36, 0
      %p283 = por %p281, %p282
      %s285 = sadd.s32 %s284, 1
      %p288 = scmp.eq.s32.totalorder %s30, 1
      %p289 = scmp.ne.s32.totalorder %s284, %s286
      %p290 = scmp.eq.s32.totalorder %s30, 0
      %p291 = por %p289, %p290
      %p292 = scmp.ne.s32.totalorder %s284, %s286
      %p293 = scmp.eq.s32.totalorder %s35, 1
      %p294 = por %p292, %p293
      %p295 = scmp.ne.s32.totalorder %s286, %s287
      %p296 = scmp.eq.s32.totalorder %s35, 0
      %p297 = por %p295, %p296
      %p298 = scmp.ne.s32.totalorder %s286, %s287
      %p299 = scmp.eq.s32.totalorder %s36, 1
      %p300 = por %p298, %p299
      %p302 = scmp.ne.s32.totalorder %s287, %s301
      %p303 = scmp.eq.s32.totalorder %s36, 0
      %p304 = por %p302, %p303
      %s306 = sadd.s32 %s305, 1
      %p309 = scmp.eq.s32.totalorder %s30, 1
      %p310 = scmp.ne.s32.totalorder %s305, %s307
      %p311 = scmp.eq.s32.totalorder %s30, 0
      %p312 = por %p310, %p311
      %p313 = scmp.ne.s32.totalorder %s305, %s307
      %p314 = scmp.eq.s32.totalorder %s35, 1
      %p315 = por %p313, %p314
      %p316 = scmp.ne.s32.totalorder %s307, %s308
      %p317 = scmp.eq.s32.totalorder %s35, 0
      %p318 = por %p316, %p317
      %p319 = scmp.ne.s32.totalorder %s307, %s308
      %p320 = scmp.eq.s32.totalorder %s36, 1
      %p321 = por %p319, %p320
      %p323 = scmp.ne.s32.totalorder %s308, %s322
      %p324 = scmp.eq.s32.totalorder %s36, 0
      %p325 = por %p323, %p324
      %s326 = ssub.s32 %s30, %s37
      %p327 = scmp.eq.s32.totalorder %s326, 0
      %s329 = sadd.s32 %s328, 1
      %s330 = scalar_select %p327, %s328, %s329
      %p333 = pneg %p327
      %p334 = scmp.eq.s32.totalorder %s30, 1
      %p335 = por %p333, %p334
      %p336 = scmp.ne.s32.totalorder %s328, %s331
      %p337 = scmp.eq.s32.totalorder %s30, 0
      %p338 = por %p336, %p337
      %p339 = scmp.ne.s32.totalorder %s328, %s331
      %p340 = scmp.eq.s32.totalorder %s35, 1
      %p341 = por %p339, %p340
      %p342 = scmp.ne.s32.totalorder %s331, %s332
      %p343 = scmp.eq.s32.totalorder %s35, 0
      %p344 = por %p342, %p343
      %p345 = scmp.ne.s32.totalorder %s331, %s332
      %p346 = scmp.eq.s32.totalorder %s36, 1
      %p347 = por %p345, %p346
      %p349 = scmp.ne.s32.totalorder %s332, %s348
      %p350 = scmp.eq.s32.totalorder %s36, 0
      %p351 = por %p349, %p350
      %s352 = ssub.s32 %s30, %s37
      %p353 = scmp.eq.s32.totalorder %s352, 0
      %s355 = sadd.s32 %s354, 1
      %s356 = scalar_select %p353, %s354, %s355
      %p359 = pneg %p353
      %p360 = scmp.eq.s32.totalorder %s30, 1
      %p361 = por %p359, %p360
      %p362 = scmp.ne.s32.totalorder %s354, %s357
      %p363 = scmp.eq.s32.totalorder %s30, 0
      %p364 = por %p362, %p363
      %p365 = scmp.ne.s32.totalorder %s354, %s357
      %p366 = scmp.eq.s32.totalorder %s35, 1
      %p367 = por %p365, %p366
      %p368 = scmp.ne.s32.totalorder %s357, %s358
      %p369 = scmp.eq.s32.totalorder %s35, 0
      %p370 = por %p368, %p369
      %p371 = scmp.ne.s32.totalorder %s357, %s358
      %p372 = scmp.eq.s32.totalorder %s36, 1
      %p373 = por %p371, %p372
      %p375 = scmp.ne.s32.totalorder %s358, %s374
      %p376 = scmp.eq.s32.totalorder %s36, 0
      %p377 = por %p375, %p376
      %p378 = scmp.le.s32.totalorder 1, %s30
      %p379 = scmp.lt.s32.totalorder %s30, 3
      %p380 = pnand %p378, %p379
      %p381 = pneg %p380
      // Predicated region
      $region9: #{tpu_custom_call.1} parent=5 // pred_check
        _
      $region10: #{tpu_custom_call.1} parent=5 // pred_check_branch
        %383 = sbr.rel (%p380) target = $region12
      $region11: #{tpu_custom_call.1} parent=5 // pred_region
        %s384 = ssub.s32 %s30, 1
        // Predicated region
        $region13: #{tpu_custom_call.1} parent=11 // pred_check
          %p385 = pneg %p129
        $region14: #{tpu_custom_call.1} parent=11 // pred_check_branch
          %387 = sbr.rel (%p385) target = $region16
        $region15: #{tpu_custom_call.1} parent=11 // pred_region
          _
        $region16: #{tpu_custom_call.1} parent=11 // pred_fallthru
          _
        // Predicated region
        $region17: #{tpu_custom_call.1} parent=11 // pred_check
          %p388 = pneg %p150
        $region18: #{tpu_custom_call.1} parent=11 // pred_check_branch
          %390 = sbr.rel (%p388) target = $region20
        $region19: #{tpu_custom_call.1} parent=11 // pred_region
          _
        $region20: #{tpu_custom_call.1} parent=11 // pred_fallthru
          _
        // Predicated region
        $region21: #{tpu_custom_call.1} parent=11 // pred_check
          %p391 = pneg %p171
        $region22: #{tpu_custom_call.1} parent=11 // pred_check_branch
          %393 = sbr.rel (%p391) target = $region24
        $region23: #{tpu_custom_call.1} parent=11 // pred_region
          _
        $region24: #{tpu_custom_call.1} parent=11 // pred_fallthru
          _
        // Predicated region
        $region25: #{tpu_custom_call.1} parent=11 // pred_check
          %p394 = pneg %p192
        $region26: #{tpu_custom_call.1} parent=11 // pred_check_branch
          %396 = sbr.rel (%p394) target = $region28
        $region27: #{tpu_custom_call.1} parent=11 // pred_region
          _
        $region28: #{tpu_custom_call.1} parent=11 // pred_fallthru
          _
        // Predicated region
        $region29: #{tpu_custom_call.1} parent=11 // pred_check
          %p397 = pneg %p213
        $region30: #{tpu_custom_call.1} parent=11 // pred_check_branch
          %399 = sbr.rel (%p397) target = $region32
        $region31: #{tpu_custom_call.1} parent=11 // pred_region
          _
        $region32: #{tpu_custom_call.1} parent=11 // pred_fallthru
          _
        // Predicated region
        $region33: #{tpu_custom_call.1} parent=11 // pred_check
          %p400 = pneg %p234
        $region34: #{tpu_custom_call.1} parent=11 // pred_check_branch
          %402 = sbr.rel (%p400) target = $region36
        $region35: #{tpu_custom_call.1} parent=11 // pred_region
          _
        $region36: #{tpu_custom_call.1} parent=11 // pred_fallthru
          _
        // Predicated region
        $region37: #{tpu_custom_call.1} parent=11 // pred_check
          %p403 = pneg %p255
        $region38: #{tpu_custom_call.1} parent=11 // pred_check_branch
          %405 = sbr.rel (%p403) target = $region40
        $region39: #{tpu_custom_call.1} parent=11 // pred_region
          _
        $region40: #{tpu_custom_call.1} parent=11 // pred_fallthru
          _
        // Predicated region
        $region41: #{tpu_custom_call.1} parent=11 // pred_check
          %p406 = pneg %p276
        $region42: #{tpu_custom_call.1} parent=11 // pred_check_branch
          %408 = sbr.rel (%p406) target = $region44
        $region43: #{tpu_custom_call.1} parent=11 // pred_region
          _
        $region44: #{tpu_custom_call.1} parent=11 // pred_fallthru
          _
        // Predicated region
        $region45: #{tpu_custom_call.1} parent=11 // pred_check
          %p409 = pneg %p297
        $region46: #{tpu_custom_call.1} parent=11 // pred_check_branch
          %411 = sbr.rel (%p409) target = $region48
        $region47: #{tpu_custom_call.1} parent=11 // pred_region
          _
        $region48: #{tpu_custom_call.1} parent=11 // pred_fallthru
          _
        // Predicated region
        $region49: #{tpu_custom_call.1} parent=11 // pred_check
          %p412 = pneg %p318
        $region50: #{tpu_custom_call.1} parent=11 // pred_check_branch
          %414 = sbr.rel (%p412) target = $region52
        $region51: #{tpu_custom_call.1} parent=11 // pred_region
          _
        $region52: #{tpu_custom_call.1} parent=11 // pred_fallthru
          _
      $region12: #{tpu_custom_call.1} parent=5 // pred_fallthru
        _
      %p415 = scmp.lt.s32.totalorder %s30, 2
      // Predicated region
      $region53: #{tpu_custom_call.1} parent=5 // pred_check
        %p416 = pneg %p415
      $region54: #{tpu_custom_call.1} parent=5 // pred_check_branch
        %418 = sbr.rel (%p416) target = $region56
      $region55: #{tpu_custom_call.1} parent=5 // pred_region
        // Predicated region
        $region57: #{tpu_custom_call.1} parent=55 // pred_check
          %p419 = pneg %p50
        $region58: #{tpu_custom_call.1} parent=55 // pred_check_branch
          %421 = sbr.rel (%p419) target = $region60
        $region59: #{tpu_custom_call.1} parent=55 // pred_region
          %p422 = scmp.lt.s32.totalorder %s30, 1
          %s423 = scalar_select %p422, %s30, 1
          %s424 = smul.addr %s423, 8
          %s425 = scalar_lea.vmem %s0, %s424
        $region60: #{tpu_custom_call.1} parent=55 // pred_fallthru
          _
        // Predicated region
        $region61: #{tpu_custom_call.1} parent=55 // pred_check
          %p426 = pneg %p76
        $region62: #{tpu_custom_call.1} parent=55 // pred_check_branch
          %428 = sbr.rel (%p426) target = $region64
        $region63: #{tpu_custom_call.1} parent=55 // pred_region
          %p429 = scmp.lt.s32.totalorder %s30, 1
          %s430 = scalar_select %p429, %s30, 1
          %s431 = smul.addr %s430, 8
          %s432 = scalar_lea.vmem %s1, %s431
        $region64: #{tpu_custom_call.1} parent=55 // pred_fallthru
          _
        // Predicated region
        $region65: #{tpu_custom_call.1} parent=55 // pred_check
          %p433 = pneg %p102
        $region66: #{tpu_custom_call.1} parent=55 // pred_check_branch
          %435 = sbr.rel (%p433) target = $region68
        $region67: #{tpu_custom_call.1} parent=55 // pred_region
          %s436 = sand.u32 %s92, 1
          %s437 = scalar_lea.sflag [#allocation3], %s436
          %s438 = sand.u32 %s92, 1
          %s439 = smul.addr %s438, 8
          %s440 = scalar_lea.vmem [#allocation2], %s439
          %s442 = ssub.s32 128, 128
          %443 = vsyncadd %s437, %s442
          %s444 = smul.addr %s30, 128
          %s445 = scalar_lea.hbm %s2, %s444
          %s447 = sshll.u32 %s440, 4
          %s448 = int_to_ptr.vmem [resolvable:$true] %s447
          %450 = dma.hbm_to_vmem [thread:$0]  %s445, 128, %s448, %s437
        $region68: #{tpu_custom_call.1} parent=55 // pred_fallthru
          _
      $region56: #{tpu_custom_call.1} parent=5 // pred_fallthru
        _
      %p451 = scmp.le.s32.totalorder 1, %s30
      %p452 = scmp.lt.s32.totalorder %s30, 3
      %p453 = pnand %p451, %p452
      %p454 = pneg %p453
      // Predicated region
      $region69: #{tpu_custom_call.1} parent=5 // pred_check
        _
      $region70: #{tpu_custom_call.1} parent=5 // pred_check_branch
        %456 = sbr.rel (%p453) target = $region72
      $region71: #{tpu_custom_call.1} parent=5 // pred_region
        %s457 = ssub.s32 %s30, 1
        %s458 = sand.u32 %s95, 1
        %s459 = scalar_lea.sflag [#allocation3], %s458
        %s460 = sand.u32 %s95, 1
        %s461 = smul.addr %s460, 8
        %s462 = scalar_lea.vmem [#allocation2], %s461
        // Predicated region
        $region73: #{tpu_custom_call.1} parent=71 // pred_check
          %p463 = pneg %p108
        $region74: #{tpu_custom_call.1} parent=71 // pred_check_branch
          %465 = sbr.rel (%p463) target = $region76
        $region75: #{tpu_custom_call.1} parent=71 // pred_region
          %466 = dma.done %s459, 128
        $region76: #{tpu_custom_call.1} parent=71 // pred_fallthru
          _
        %p467 = scmp.lt.s32.totalorder %s35, 1
        %s468 = scalar_select %p467, %s35, 1
        %s469 = smul.addr %s468, 8
        %s470 = scalar_lea.vmem %s0, %s469
        %p471 = pneg %p56
        %p472 = pneg %p53
        %p473 = scmp.lt.s32.totalorder %s35, 1
        %s474 = scalar_select %p473, %s35, 1
        %s475 = smul.addr %s474, 8
        %s476 = scalar_lea.vmem %s1, %s475
        %p477 = pneg %p82
        %p478 = pneg %p79
        %s479 = sand.u32 %s95, 1
        %s480 = scalar_lea.sflag [#allocation3], %s479
        %s481 = sand.u32 %s95, 1
        %s482 = smul.addr %s481, 8
        %s483 = scalar_lea.vmem [#allocation2], %s482
        %p484 = pneg %p108
        %p485 = pneg %p105
        %p486 = pneg %p129
        %p487 = pneg %p126
        %p488 = pneg %p150
        %p489 = pneg %p147
        %p490 = pneg %p171
        %p491 = pneg %p168
        %p492 = pneg %p192
        %p493 = pneg %p189
        %p494 = pneg %p213
        %p495 = pneg %p210
        %p496 = pneg %p234
        %p497 = pneg %p231
        %p498 = pneg %p255
        %p499 = pneg %p252
        %p500 = pneg %p276
        %p501 = pneg %p273
        %p502 = pneg %p297
        %p503 = pneg %p294
        %p504 = pneg %p318
        %p505 = pneg %p315
        %p506 = pneg %p344
        %p507 = pneg %p341
        %s508 = sand.u32 %s331, 1
        %s509 = scalar_lea.sflag [#allocation4], %s508
        %s510 = sand.u32 %s331, 1
        %s511 = smul.addr %s510, 8
        %s512 = scalar_lea.vmem [#allocation5], %s511
        %p513 = pneg %p370
        %p514 = pneg %p367
        %s515 = sand.u32 %s357, 1
        %s516 = scalar_lea.sflag [#allocation7], %s515
        %s517 = sand.u32 %s357, 1
        %s518 = smul.addr %s517, 32
        %s519 = scalar_lea.vmem [#allocation6], %s518
        %p520 = scmp.lt.s32.totalorder %s35, 1
        %s521 = scalar_select %p520, %s35, 1
        %s522 = smul.addr %s521, 8
        %s523 = scalar_lea.vmem %s0, %s522
        %p524 = scmp.lt.s32.totalorder %s35, 1
        %s525 = scalar_select %p524, %s35, 1
        %s526 = smul.addr %s525, 8
        %s527 = scalar_lea.vmem %s1, %s526
        %v528 = vld [vmem:[%s523] sm:$0xff]
        %v529 = vld [vmem:[%s527] sm:$0xff]
        %v530 = vld [vmem:[%s462] sm:$0xff]
        %v531 = vld [vmem:[%s3] sm:$0xff]
        %v532 = vld [vmem:[%s3 + $0x8] sm:$0xff]
        %v533 = vld [vmem:[%s3 + $0x10] sm:$0xff]
        %v534 = vld [vmem:[%s3 + $0x18] sm:$0xff]
        %vm535 = vcmask 261120
        %v537 = vsel %vm535, %v528, 0
        %539 = vmatprep.subr.mxu0 0.0
        %540 = vmatpush1.msra.mxu0 0.0
        %541 = vmatprep.subr.mxu0 0.0
        %542 = vmatpush1.msra.mxu0 0.0
        %543 = vmatprep.subr.mxu0 0.0
        %544 = vmatpush1.msra.mxu0 0.0
        %545 = vmatprep.subr.mxu0 0.0
        %546 = vmatpush1.msra.mxu0 0.0
        %547 = vmatprep.subr.mxu0 0.0
        %548 = vmatpush1.msra.mxu0 0.0
        %549 = vmatprep.subr.mxu0 0.0
        %550 = vmatpush1.msra.mxu0 0.0
        %551 = vmatprep.subr.mxu0 0.0
        %552 = vmatpush1.msra.mxu0 0.0
        %553 = vmatprep.subr.mxu0 0.0
        %554 = vmatpush1.msra.mxu0 0.0
        %555 = vmatprep.subr.mxu0 0.0
        %556 = vmatpush1.msra.mxu0 0.0
        %557 = vmatprep.subr.mxu0 0.0
        %558 = vmatpush1.msra.mxu0 0.0
        %559 = vmatprep.subr.mxu0 0.0
        %560 = vmatpush1.msra.mxu0 0.0
        %561 = vmatprep.subr.mxu0 0.0
        %562 = vmatpush1.msra.mxu0 0.0
        %563 = vmatprep.subr.mxu0 0.0
        %564 = vmatpush1.msra.mxu0 %v534
        %565 = vmatprep.subr.mxu0 0.0
        %566 = vmatpush1.msra.mxu0 %v533
        %567 = vmatprep.subr.mxu0 0.0
        %568 = vmatpush1.msra.mxu0 %v532
        %569 = vmatprep.subr.mxu0 0.0
        %570 = vmatpush1.msra.mxu0 %v531
        %571 = vmatprep.subr.mxu0 0.0
        %572 = vmatpush2.msra.mxu0 0.0
        %573 = vmatprep.subr.mxu0 0.0
        %574 = vmatpush2.msra.mxu0 0.0
        %575 = vmatprep.subr.mxu0 0.0
        %576 = vmatpush2.msra.mxu0 0.0
        %577 = vmatprep.subr.mxu0 0.0
        %578 = vmatpush2.msra.mxu0 0.0
        %579 = vmatprep.subr.mxu0 0.0
        %580 = vmatpush2.msra.mxu0 0.0
        %581 = vmatprep.subr.mxu0 0.0
        %582 = vmatpush2.msra.mxu0 0.0
        %583 = vmatprep.subr.mxu0 0.0
        %584 = vmatpush2.msra.mxu0 0.0
        %585 = vmatprep.subr.mxu0 0.0
        %586 = vmatpush2.msra.mxu0 0.0
        %587 = vmatprep.subr.mxu0 0.0
        %588 = vmatpush2.msra.mxu0 0.0
        %589 = vmatprep.subr.mxu0 0.0
        %590 = vmatpush2.msra.mxu0 0.0
        %591 = vmatprep.subr.mxu0 0.0
        %592 = vmatpush2.msra.mxu0 0.0
        %593 = vmatprep.subr.mxu0 0.0
        %594 = vmatpush2.msra.mxu0 0.0
        %595 = vmatprep.subr.mxu0 0.0
        %596 = vmatpush2.msra.mxu0 0.0
        %597 = vmatprep.subr.mxu0 0.0
        %598 = vmatpush2.msra.mxu0 0.0
        %599 = vmatprep.subr.mxu0 0.0
        %600 = vmatpush2.msra.mxu0 0.0
        %601 = vmatprep.subr.mxu0 0.0
        %602 = vmatpush2.msra.mxu0 0.0
        %603 = vmatprep.mubr.f32.mxu0 0.0
        %604 = vmatmul.mubr.f32.gmra.mxu0 %v537
        %v605 = vpop.f32.mrf.mxu0
        %v606 = vadd.f32 0.0, %v605
        %v607 = vpop.f32.mrf.mxu0
        %608 = vdwg.mxu0
        %v609 = vld [vmem:[%s4] sm:$0xff]
        %v610 = vld [vmem:[%s4 + $0x8] sm:$0xff]
        %v611 = vld [vmem:[%s4 + $0x10] sm:$0xff]
        %v612 = vld [vmem:[%s4 + $0x18] sm:$0xff]
        %v614 = vsel %vm535, %v529, 0
        %616 = vmatprep.subr.mxu0 0.0
        %617 = vmatpush1.msra.mxu0 0.0
        %618 = vmatprep.subr.mxu0 0.0
        %619 = vmatpush1.msra.mxu0 0.0
        %620 = vmatprep.subr.mxu0 0.0
        %621 = vmatpush1.msra.mxu0 0.0
        %622 = vmatprep.subr.mxu0 0.0
        %623 = vmatpush1.msra.mxu0 0.0
        %624 = vmatprep.subr.mxu0 0.0
        %625 = vmatpush1.msra.mxu0 0.0
        %626 = vmatprep.subr.mxu0 0.0
        %627 = vmatpush1.msra.mxu0 0.0
        %628 = vmatprep.subr.mxu0 0.0
        %629 = vmatpush1.msra.mxu0 0.0
        %630 = vmatprep.subr.mxu0 0.0
        %631 = vmatpush1.msra.mxu0 0.0
        %632 = vmatprep.subr.mxu0 0.0
        %633 = vmatpush1.msra.mxu0 0.0
        %634 = vmatprep.subr.mxu0 0.0
        %635 = vmatpush1.msra.mxu0 0.0
        %636 = vmatprep.subr.mxu0 0.0
        %637 = vmatpush1.msra.mxu0 0.0
        %638 = vmatprep.subr.mxu0 0.0
        %639 = vmatpush1.msra.mxu0 0.0
        %640 = vmatprep.subr.mxu0 0.0
        %641 = vmatpush1.msra.mxu0 %v612
        %642 = vmatprep.subr.mxu0 0.0
        %643 = vmatpush1.msra.mxu0 %v611
        %644 = vmatprep.subr.mxu0 0.0
        %645 = vmatpush1.msra.mxu0 %v610
        %646 = vmatprep.subr.mxu0 0.0
        %647 = vmatpush1.msra.mxu0 %v609
        %648 = vmatprep.subr.mxu0 0.0
        %649 = vmatpush2.msra.mxu0 0.0
        %650 = vmatprep.subr.mxu0 0.0
        %651 = vmatpush2.msra.mxu0 0.0
        %652 = vmatprep.subr.mxu0 0.0
        %653 = vmatpush2.msra.mxu0 0.0
        %654 = vmatprep.subr.mxu0 0.0
        %655 = vmatpush2.msra.mxu0 0.0
        %656 = vmatprep.subr.mxu0 0.0
        %657 = vmatpush2.msra.mxu0 0.0
        %658 = vmatprep.subr.mxu0 0.0
        %659 = vmatpush2.msra.mxu0 0.0
        %660 = vmatprep.subr.mxu0 0.0
        %661 = vmatpush2.msra.mxu0 0.0
        %662 = vmatprep.subr.mxu0 0.0
        %663 = vmatpush2.msra.mxu0 0.0
        %664 = vmatprep.subr.mxu0 0.0
        %665 = vmatpush2.msra.mxu0 0.0
        %666 = vmatprep.subr.mxu0 0.0
        %667 = vmatpush2.msra.mxu0 0.0
        %668 = vmatprep.subr.mxu0 0.0
        %669 = vmatpush2.msra.mxu0 0.0
        %670 = vmatprep.subr.mxu0 0.0
        %671 = vmatpush2.msra.mxu0 0.0
        %672 = vmatprep.subr.mxu0 0.0
        %673 = vmatpush2.msra.mxu0 0.0
        %674 = vmatprep.subr.mxu0 0.0
        %675 = vmatpush2.msra.mxu0 0.0
        %676 = vmatprep.subr.mxu0 0.0
        %677 = vmatpush2.msra.mxu0 0.0
        %678 = vmatprep.subr.mxu0 0.0
        %679 = vmatpush2.msra.mxu0 0.0
        %680 = vmatprep.mubr.f32.mxu0 0.0
        %681 = vmatmul.mubr.f32.gmra.mxu0 %v614
        %v682 = vpop.f32.mrf.mxu0
        %v683 = vadd.f32 0.0, %v682
        %v684 = vpop.f32.mrf.mxu0
        %685 = vdwg.mxu0
        %v686 = vld [vmem:[%s5] sm:$0xff]
        %v687 = vld [vmem:[%s5 + $0x8] sm:$0xff]
        %v688 = vld [vmem:[%s5 + $0x10] sm:$0xff]
        %v689 = vld [vmem:[%s5 + $0x18] sm:$0xff]
        %v691 = vsel %vm535, %v530, 0
        %693 = vmatprep.subr.mxu0 0.0
        %694 = vmatpush1.msra.mxu0 0.0
        %695 = vmatprep.subr.mxu0 0.0
        %696 = vmatpush1.msra.mxu0 0.0
        %697 = vmatprep.subr.mxu0 0.0
        %698 = vmatpush1.msra.mxu0 0.0
        %699 = vmatprep.subr.mxu0 0.0
        %700 = vmatpush1.msra.mxu0 0.0
        %701 = vmatprep.subr.mxu0 0.0
        %702 = vmatpush1.msra.mxu0 0.0
        %703 = vmatprep.subr.mxu0 0.0
        %704 = vmatpush1.msra.mxu0 0.0
        %705 = vmatprep.subr.mxu0 0.0
        %706 = vmatpush1.msra.mxu0 0.0
        %707 = vmatprep.subr.mxu0 0.0
        %708 = vmatpush1.msra.mxu0 0.0
        %709 = vmatprep.subr.mxu0 0.0
        %710 = vmatpush1.msra.mxu0 0.0
        %711 = vmatprep.subr.mxu0 0.0
        %712 = vmatpush1.msra.mxu0 0.0
        %713 = vmatprep.subr.mxu0 0.0
        %714 = vmatpush1.msra.mxu0 0.0
        %715 = vmatprep.subr.mxu0 0.0
        %716 = vmatpush1.msra.mxu0 0.0
        %717 = vmatprep.subr.mxu0 0.0
        %718 = vmatpush1.msra.mxu0 %v689
        %719 = vmatprep.subr.mxu0 0.0
        %720 = vmatpush1.msra.mxu0 %v688
        %721 = vmatprep.subr.mxu0 0.0
        %722 = vmatpush1.msra.mxu0 %v687
        %723 = vmatprep.subr.mxu0 0.0
        %724 = vmatpush1.msra.mxu0 %v686
        %725 = vmatprep.subr.mxu0 0.0
        %726 = vmatpush2.msra.mxu0 0.0
        %727 = vmatprep.subr.mxu0 0.0
        %728 = vmatpush2.msra.mxu0 0.0
        %729 = vmatprep.subr.mxu0 0.0
        %730 = vmatpush2.msra.mxu0 0.0
        %731 = vmatprep.subr.mxu0 0.0
        %732 = vmatpush2.msra.mxu0 0.0
        %733 = vmatprep.subr.mxu0 0.0
        %734 = vmatpush2.msra.mxu0 0.0
        %735 = vmatprep.subr.mxu0 0.0
        %736 = vmatpush2.msra.mxu0 0.0
        %737 = vmatprep.subr.mxu0 0.0
        %738 = vmatpush2.msra.mxu0 0.0
        %739 = vmatprep.subr.mxu0 0.0
        %740 = vmatpush2.msra.mxu0 0.0
        %741 = vmatprep.subr.mxu0 0.0
        %742 = vmatpush2.msra.mxu0 0.0
        %743 = vmatprep.subr.mxu0 0.0
        %744 = vmatpush2.msra.mxu0 0.0
        %745 = vmatprep.subr.mxu0 0.0
        %746 = vmatpush2.msra.mxu0 0.0
        %747 = vmatprep.subr.mxu0 0.0
        %748 = vmatpush2.msra.mxu0 0.0
        %749 = vmatprep.subr.mxu0 0.0
        %750 = vmatpush2.msra.mxu0 0.0
        %751 = vmatprep.subr.mxu0 0.0
        %752 = vmatpush2.msra.mxu0 0.0
        %753 = vmatprep.subr.mxu0 0.0
        %754 = vmatpush2.msra.mxu0 0.0
        %755 = vmatprep.subr.mxu0 0.0
        %756 = vmatpush2.msra.mxu0 0.0
        %757 = vmatprep.mubr.f32.mxu0 0.0
        %758 = vmatmul.mubr.f32.gmra.mxu0 %v691
        %v759 = vpop.f32.mrf.mxu0
        %v760 = vadd.f32 0.0, %v759
        %v761 = vpop.f32.mrf.mxu0
        %762 = vdwg.mxu0
        %v763 = vmul.f32 %v606, 0.25
        %vm764 = vcmask 130048
        %v766 = vsel %vm764, %v763, 0
        %v769 = vsel %vm764, %v683, 0
        %771 = vmatprep.subr.mxu0 0.0
        %772 = vmatpush1.xpose.msra.mxu0 0.0
        %773 = vmatprep.subr.mxu0 0.0
        %774 = vmatpush1.xpose.msra.mxu0 0.0
        %775 = vmatprep.subr.mxu0 0.0
        %776 = vmatpush1.xpose.msra.mxu0 0.0
        %777 = vmatprep.subr.mxu0 0.0
        %778 = vmatpush1.xpose.msra.mxu0 0.0
        %779 = vmatprep.subr.mxu0 0.0
        %780 = vmatpush1.xpose.msra.mxu0 0.0
        %781 = vmatprep.subr.mxu0 0.0
        %782 = vmatpush1.xpose.msra.mxu0 0.0
        %783 = vmatprep.subr.mxu0 0.0
        %784 = vmatpush1.xpose.msra.mxu0 0.0
        %785 = vmatprep.subr.mxu0 0.0
        %786 = vmatpush1.xpose.msra.mxu0 0.0
        %787 = vmatprep.subr.mxu0 0.0
        %788 = vmatpush1.xpose.msra.mxu0 0.0
        %789 = vmatprep.subr.mxu0 0.0
        %790 = vmatpush1.xpose.msra.mxu0 0.0
        %791 = vmatprep.subr.mxu0 0.0
        %792 = vmatpush1.xpose.msra.mxu0 0.0
        %793 = vmatprep.subr.mxu0 0.0
        %794 = vmatpush1.xpose.msra.mxu0 0.0
        %795 = vmatprep.subr.mxu0 0.0
        %796 = vmatpush1.xpose.msra.mxu0 0.0
        %797 = vmatprep.subr.mxu0 0.0
        %798 = vmatpush1.xpose.msra.mxu0 0.0
        %799 = vmatprep.subr.mxu0 0.0
        %800 = vmatpush1.xpose.msra.mxu0 0.0
        %801 = vmatprep.subr.mxu0 0.0
        %802 = vmatpush1.xpose.msra.mxu0 %v769
        %803 = vmatprep.subr.mxu0 0.0
        %804 = vmatpush2.xpose.msra.mxu0 0.0
        %805 = vmatprep.subr.mxu0 0.0
        %806 = vmatpush2.xpose.msra.mxu0 0.0
        %807 = vmatprep.subr.mxu0 0.0
        %808 = vmatpush2.xpose.msra.mxu0 0.0
        %809 = vmatprep.subr.mxu0 0.0
        %810 = vmatpush2.xpose.msra.mxu0 0.0
        %811 = vmatprep.subr.mxu0 0.0
        %812 = vmatpush2.xpose.msra.mxu0 0.0
        %813 = vmatprep.subr.mxu0 0.0
        %814 = vmatpush2.xpose.msra.mxu0 0.0
        %815 = vmatprep.subr.mxu0 0.0
        %816 = vmatpush2.xpose.msra.mxu0 0.0
        %817 = vmatprep.subr.mxu0 0.0
        %818 = vmatpush2.xpose.msra.mxu0 0.0
        %819 = vmatprep.subr.mxu0 0.0
        %820 = vmatpush2.xpose.msra.mxu0 0.0
        %821 = vmatprep.subr.mxu0 0.0
        %822 = vmatpush2.xpose.msra.mxu0 0.0
        %823 = vmatprep.subr.mxu0 0.0
        %824 = vmatpush2.xpose.msra.mxu0 0.0
        %825 = vmatprep.subr.mxu0 0.0
        %826 = vmatpush2.xpose.msra.mxu0 0.0
        %827 = vmatprep.subr.mxu0 0.0
        %828 = vmatpush2.xpose.msra.mxu0 0.0
        %829 = vmatprep.subr.mxu0 0.0
        %830 = vmatpush2.xpose.msra.mxu0 0.0
        %831 = vmatprep.subr.mxu0 0.0
        %832 = vmatpush2.xpose.msra.mxu0 0.0
        %833 = vmatprep.subr.mxu0 0.0
        %834 = vmatpush2.xpose.msra.mxu0 0.0
        %835 = vmatprep.mubr.f32.mxu0 0.0
        %836 = vmatmul.mubr.f32.gmra.mxu0 %v766
        %v837 = vpop.f32.mrf.mxu0
        %v838 = vadd.f32 0.0, %v837
        %v839 = vpop.f32.mrf.mxu0
        %840 = vdwg.mxu0
        %vm841 = vcmask 64512
        %v842 = vsel %vm841, %v838, -inf
        %843 = vmax.xlane.f32.xlu0 %v842
        %v844 = vpop.xlane.xlu0 %843
        %v845 = vsub.f32 %v838, %v844
        %v846 = vmul.f32 %v845, 1.442695
        %v847 = vpow.pop %v846
        %v848 = vsel %vm841, %v847, 0.0
        %849 = vadd.xlane.f32.xlu0 %v848
        %v850 = vpop.xlane.xlu0 %849
        %v851 = vrcp.pop %v850
        %v852 = vmul.f32 %v847, %v851
        %v854 = vsel %vm841, %v852, 0
        %856 = vmatprep.subr.mxu0 0.0
        %857 = vmatpush1.msra.mxu0 0.0
        %858 = vmatprep.subr.mxu0 0.0
        %859 = vmatpush1.msra.mxu0 0.0
        %860 = vmatprep.subr.mxu0 0.0
        %861 = vmatpush1.msra.mxu0 0.0
        %862 = vmatprep.subr.mxu0 0.0
        %863 = vmatpush1.msra.mxu0 0.0
        %864 = vmatprep.subr.mxu0 0.0
        %865 = vmatpush1.msra.mxu0 0.0
        %866 = vmatprep.subr.mxu0 0.0
        %867 = vmatpush1.msra.mxu0 0.0
        %868 = vmatprep.subr.mxu0 0.0
        %869 = vmatpush1.msra.mxu0 0.0
        %870 = vmatprep.subr.mxu0 0.0
        %871 = vmatpush1.msra.mxu0 0.0
        %872 = vmatprep.subr.mxu0 0.0
        %873 = vmatpush1.msra.mxu0 0.0
        %874 = vmatprep.subr.mxu0 0.0
        %875 = vmatpush1.msra.mxu0 0.0
        %876 = vmatprep.subr.mxu0 0.0
        %877 = vmatpush1.msra.mxu0 0.0
        %878 = vmatprep.subr.mxu0 0.0
        %879 = vmatpush1.msra.mxu0 0.0
        %880 = vmatprep.subr.mxu0 0.0
        %881 = vmatpush1.msra.mxu0 0.0
        %882 = vmatprep.subr.mxu0 0.0
        %883 = vmatpush1.msra.mxu0 0.0
        %884 = vmatprep.subr.mxu0 0.0
        %885 = vmatpush1.msra.mxu0 0.0
        %886 = vmatprep.subr.mxu0 0.0
        %887 = vmatpush1.msra.mxu0 %v760
        %888 = vmatprep.subr.mxu0 0.0
        %889 = vmatpush2.msra.mxu0 0.0
        %890 = vmatprep.subr.mxu0 0.0
        %891 = vmatpush2.msra.mxu0 0.0
        %892 = vmatprep.subr.mxu0 0.0
        %893 = vmatpush2.msra.mxu0 0.0
        %894 = vmatprep.subr.mxu0 0.0
        %895 = vmatpush2.msra.mxu0 0.0
        %896 = vmatprep.subr.mxu0 0.0
        %897 = vmatpush2.msra.mxu0 0.0
        %898 = vmatprep.subr.mxu0 0.0
        %899 = vmatpush2.msra.mxu0 0.0
        %900 = vmatprep.subr.mxu0 0.0
        %901 = vmatpush2.msra.mxu0 0.0
        %902 = vmatprep.subr.mxu0 0.0
        %903 = vmatpush2.msra.mxu0 0.0
        %904 = vmatprep.subr.mxu0 0.0
        %905 = vmatpush2.msra.mxu0 0.0
        %906 = vmatprep.subr.mxu0 0.0
        %907 = vmatpush2.msra.mxu0 0.0
        %908 = vmatprep.subr.mxu0 0.0
        %909 = vmatpush2.msra.mxu0 0.0
        %910 = vmatprep.subr.mxu0 0.0
        %911 = vmatpush2.msra.mxu0 0.0
        %912 = vmatprep.subr.mxu0 0.0
        %913 = vmatpush2.msra.mxu0 0.0
        %914 = vmatprep.subr.mxu0 0.0
        %915 = vmatpush2.msra.mxu0 0.0
        %916 = vmatprep.subr.mxu0 0.0
        %917 = vmatpush2.msra.mxu0 0.0
        %918 = vmatprep.subr.mxu0 0.0
        %919 = vmatpush2.msra.mxu0 0.0
        %920 = vmatprep.mubr.f32.mxu0 0.0
        %921 = vmatmul.mubr.f32.gmra.mxu0 %v854
        %v922 = vpop.f32.mrf.mxu0
        %v923 = vadd.f32 0.0, %v922
        %v924 = vpop.f32.mrf.mxu0
        %925 = vdwg.mxu0
        %v926 = vld [vmem:[%s6] sm:$0xff]
        %v927 = vld [vmem:[%s6 + $0x8] sm:$0xff]
        %928 = vrot.lane.b32.xlu0 %v763, 112
        %v929 = vpop.permute.xlu0 %928
        %930 = vrot.lane.b32.xlu0 %v683, 112
        %v931 = vpop.permute.xlu0 %930
        %v932 = vsel %vm764, %v929, 0
        %v934 = vsel %vm764, %v931, 0
        %936 = vmatprep.subr.mxu0 0.0
        %937 = vmatpush1.xpose.msra.mxu0 0.0
        %938 = vmatprep.subr.mxu0 0.0
        %939 = vmatpush1.xpose.msra.mxu0 0.0
        %940 = vmatprep.subr.mxu0 0.0
        %941 = vmatpush1.xpose.msra.mxu0 0.0
        %942 = vmatprep.subr.mxu0 0.0
        %943 = vmatpush1.xpose.msra.mxu0 0.0
        %944 = vmatprep.subr.mxu0 0.0
        %945 = vmatpush1.xpose.msra.mxu0 0.0
        %946 = vmatprep.subr.mxu0 0.0
        %947 = vmatpush1.xpose.msra.mxu0 0.0
        %948 = vmatprep.subr.mxu0 0.0
        %949 = vmatpush1.xpose.msra.mxu0 0.0
        %950 = vmatprep.subr.mxu0 0.0
        %951 = vmatpush1.xpose.msra.mxu0 0.0
        %952 = vmatprep.subr.mxu0 0.0
        %953 = vmatpush1.xpose.msra.mxu0 0.0
        %954 = vmatprep.subr.mxu0 0.0
        %955 = vmatpush1.xpose.msra.mxu0 0.0
        %956 = vmatprep.subr.mxu0 0.0
        %957 = vmatpush1.xpose.msra.mxu0 0.0
        %958 = vmatprep.subr.mxu0 0.0
        %959 = vmatpush1.xpose.msra.mxu0 0.0
        %960 = vmatprep.subr.mxu0 0.0
        %961 = vmatpush1.xpose.msra.mxu0 0.0
        %962 = vmatprep.subr.mxu0 0.0
        %963 = vmatpush1.xpose.msra.mxu0 0.0
        %964 = vmatprep.subr.mxu0 0.0
        %965 = vmatpush1.xpose.msra.mxu0 0.0
        %966 = vmatprep.subr.mxu0 0.0
        %967 = vmatpush1.xpose.msra.mxu0 %v934
        %968 = vmatprep.subr.mxu0 0.0
        %969 = vmatpush2.xpose.msra.mxu0 0.0
        %970 = vmatprep.subr.mxu0 0.0
        %971 = vmatpush2.xpose.msra.mxu0 0.0
        %972 = vmatprep.subr.mxu0 0.0
        %973 = vmatpush2.xpose.msra.mxu0 0.0
        %974 = vmatprep.subr.mxu0 0.0
        %975 = vmatpush2.xpose.msra.mxu0 0.0
        %976 = vmatprep.subr.mxu0 0.0
        %977 = vmatpush2.xpose.msra.mxu0 0.0
        %978 = vmatprep.subr.mxu0 0.0
        %979 = vmatpush2.xpose.msra.mxu0 0.0
        %980 = vmatprep.subr.mxu0 0.0
        %981 = vmatpush2.xpose.msra.mxu0 0.0
        %982 = vmatprep.subr.mxu0 0.0
        %983 = vmatpush2.xpose.msra.mxu0 0.0
        %984 = vmatprep.subr.mxu0 0.0
        %985 = vmatpush2.xpose.msra.mxu0 0.0
        %986 = vmatprep.subr.mxu0 0.0
        %987 = vmatpush2.xpose.msra.mxu0 0.0
        %988 = vmatprep.subr.mxu0 0.0
        %989 = vmatpush2.xpose.msra.mxu0 0.0
        %990 = vmatprep.subr.mxu0 0.0
        %991 = vmatpush2.xpose.msra.mxu0 0.0
        %992 = vmatprep.subr.mxu0 0.0
        %993 = vmatpush2.xpose.msra.mxu0 0.0
        %994 = vmatprep.subr.mxu0 0.0
        %995 = vmatpush2.xpose.msra.mxu0 0.0
        %996 = vmatprep.subr.mxu0 0.0
        %997 = vmatpush2.xpose.msra.mxu0 0.0
        %998 = vmatprep.subr.mxu0 0.0
        %999 = vmatpush2.xpose.msra.mxu0 0.0
        %1000 = vmatprep.mubr.f32.mxu0 0.0
        %1001 = vmatmul.mubr.f32.gmra.mxu0 %v932
        %v1002 = vpop.f32.mrf.mxu0
        %v1003 = vadd.f32 0.0, %v1002
        %v1004 = vpop.f32.mrf.mxu0
        %1005 = vdwg.mxu0
        %v1006 = vsel %vm841, %v1003, -inf
        %1007 = vmax.xlane.f32.xlu0 %v1006
        %v1008 = vpop.xlane.xlu0 %1007
        %v1009 = vsub.f32 %v1003, %v1008
        %v1010 = vmul.f32 %v1009, 1.442695
        %v1011 = vpow.pop %v1010
        %v1012 = vsel %vm841, %v1011, 0.0
        %1013 = vadd.xlane.f32.xlu0 %v1012
        %v1014 = vpop.xlane.xlu0 %1013
        %v1015 = vrcp.pop %v1014
        %v1016 = vmul.f32 %v1011, %v1015
        %1018 = vrot.lane.b32.xlu0 %v760, 112
        %v1019 = vpop.permute.xlu0 %1018
        %v1022 = vsel %vm841, %v1016, 0
        %1024 = vmatprep.subr.mxu0 0.0
        %1025 = vmatpush1.msra.mxu0 0.0
        %1026 = vmatprep.subr.mxu0 0.0
        %1027 = vmatpush1.msra.mxu0 0.0
        %1028 = vmatprep.subr.mxu0 0.0
        %1029 = vmatpush1.msra.mxu0 0.0
        %1030 = vmatprep.subr.mxu0 0.0
        %1031 = vmatpush1.msra.mxu0 0.0
        %1032 = vmatprep.subr.mxu0 0.0
        %1033 = vmatpush1.msra.mxu0 0.0
        %1034 = vmatprep.subr.mxu0 0.0
        %1035 = vmatpush1.msra.mxu0 0.0
        %1036 = vmatprep.subr.mxu0 0.0
        %1037 = vmatpush1.msra.mxu0 0.0
        %1038 = vmatprep.subr.mxu0 0.0
        %1039 = vmatpush1.msra.mxu0 0.0
        %1040 = vmatprep.subr.mxu0 0.0
        %1041 = vmatpush1.msra.mxu0 0.0
        %1042 = vmatprep.subr.mxu0 0.0
        %1043 = vmatpush1.msra.mxu0 0.0
        %1044 = vmatprep.subr.mxu0 0.0
        %1045 = vmatpush1.msra.mxu0 0.0
        %1046 = vmatprep.subr.mxu0 0.0
        %1047 = vmatpush1.msra.mxu0 0.0
        %1048 = vmatprep.subr.mxu0 0.0
        %1049 = vmatpush1.msra.mxu0 0.0
        %1050 = vmatprep.subr.mxu0 0.0
        %1051 = vmatpush1.msra.mxu0 0.0
        %1052 = vmatprep.subr.mxu0 0.0
        %1053 = vmatpush1.msra.mxu0 0.0
        %1054 = vmatprep.subr.mxu0 0.0
        %1055 = vmatpush1.msra.mxu0 %v1019
        %1056 = vmatprep.subr.mxu0 0.0
        %1057 = vmatpush2.msra.mxu0 0.0
        %1058 = vmatprep.subr.mxu0 0.0
        %1059 = vmatpush2.msra.mxu0 0.0
        %1060 = vmatprep.subr.mxu0 0.0
        %1061 = vmatpush2.msra.mxu0 0.0
        %1062 = vmatprep.subr.mxu0 0.0
        %1063 = vmatpush2.msra.mxu0 0.0
        %1064 = vmatprep.subr.mxu0 0.0
        %1065 = vmatpush2.msra.mxu0 0.0
        %1066 = vmatprep.subr.mxu0 0.0
        %1067 = vmatpush2.msra.mxu0 0.0
        %1068 = vmatprep.subr.mxu0 0.0
        %1069 = vmatpush2.msra.mxu0 0.0
        %1070 = vmatprep.subr.mxu0 0.0
        %1071 = vmatpush2.msra.mxu0 0.0
        %1072 = vmatprep.subr.mxu0 0.0
        %1073 = vmatpush2.msra.mxu0 0.0
        %1074 = vmatprep.subr.mxu0 0.0
        %1075 = vmatpush2.msra.mxu0 0.0
        %1076 = vmatprep.subr.mxu0 0.0
        %1077 = vmatpush2.msra.mxu0 0.0
        %1078 = vmatprep.subr.mxu0 0.0
        %1079 = vmatpush2.msra.mxu0 0.0
        %1080 = vmatprep.subr.mxu0 0.0
        %1081 = vmatpush2.msra.mxu0 0.0
        %1082 = vmatprep.subr.mxu0 0.0
        %1083 = vmatpush2.msra.mxu0 0.0
        %1084 = vmatprep.subr.mxu0 0.0
        %1085 = vmatpush2.msra.mxu0 0.0
        %1086 = vmatprep.subr.mxu0 0.0
        %1087 = vmatpush2.msra.mxu0 0.0
        %1088 = vmatprep.mubr.f32.mxu0 0.0
        %1089 = vmatmul.mubr.f32.gmra.mxu0 %v1022
        %v1090 = vpop.f32.mrf.mxu0
        %v1091 = vadd.f32 0.0, %v1090
        %v1092 = vpop.f32.mrf.mxu0
        %1093 = vdwg.mxu0
        %v1094 = vld [vmem:[%s6 + $0x10] sm:$0xff]
        %v1095 = vld [vmem:[%s6 + $0x18] sm:$0xff]
        %v1097 = vsel %vm764, %v1091, 0
        %1099 = vmatprep.subr.mxu0 0.0
        %1100 = vmatpush1.msra.mxu0 0.0
        %1101 = vmatprep.subr.mxu0 0.0
        %1102 = vmatpush1.msra.mxu0 0.0
        %1103 = vmatprep.subr.mxu0 0.0
        %1104 = vmatpush1.msra.mxu0 0.0
        %1105 = vmatprep.subr.mxu0 0.0
        %1106 = vmatpush1.msra.mxu0 0.0
        %1107 = vmatprep.subr.mxu0 0.0
        %1108 = vmatpush1.msra.mxu0 0.0
        %1109 = vmatprep.subr.mxu0 0.0
        %1110 = vmatpush1.msra.mxu0 0.0
        %1111 = vmatprep.subr.mxu0 0.0
        %1112 = vmatpush1.msra.mxu0 0.0
        %1113 = vmatprep.subr.mxu0 0.0
        %1114 = vmatpush1.msra.mxu0 0.0
        %1115 = vmatprep.subr.mxu0 0.0
        %1116 = vmatpush1.msra.mxu0 0.0
        %1117 = vmatprep.subr.mxu0 0.0
        %1118 = vmatpush1.msra.mxu0 0.0
        %1119 = vmatprep.subr.mxu0 0.0
        %1120 = vmatpush1.msra.mxu0 0.0
        %1121 = vmatprep.subr.mxu0 0.0
        %1122 = vmatpush1.msra.mxu0 0.0
        %1123 = vmatprep.subr.mxu0 0.0
        %1124 = vmatpush1.msra.mxu0 0.0
        %1125 = vmatprep.subr.mxu0 0.0
        %1126 = vmatpush1.msra.mxu0 0.0
        %1127 = vmatprep.subr.mxu0 0.0
        %1128 = vmatpush1.msra.mxu0 %v1095
        %1129 = vmatprep.subr.mxu0 0.0
        %1130 = vmatpush1.msra.mxu0 %v1094
        %1131 = vmatprep.subr.mxu0 0.0
        %1132 = vmatpush2.msra.mxu0 0.0
        %1133 = vmatprep.subr.mxu0 0.0
        %1134 = vmatpush2.msra.mxu0 0.0
        %1135 = vmatprep.subr.mxu0 0.0
        %1136 = vmatpush2.msra.mxu0 0.0
        %1137 = vmatprep.subr.mxu0 0.0
        %1138 = vmatpush2.msra.mxu0 0.0
        %1139 = vmatprep.subr.mxu0 0.0
        %1140 = vmatpush2.msra.mxu0 0.0
        %1141 = vmatprep.subr.mxu0 0.0
        %1142 = vmatpush2.msra.mxu0 0.0
        %1143 = vmatprep.subr.mxu0 0.0
        %1144 = vmatpush2.msra.mxu0 0.0
        %1145 = vmatprep.subr.mxu0 0.0
        %1146 = vmatpush2.msra.mxu0 0.0
        %1147 = vmatprep.subr.mxu0 0.0
        %1148 = vmatpush2.msra.mxu0 0.0
        %1149 = vmatprep.subr.mxu0 0.0
        %1150 = vmatpush2.msra.mxu0 0.0
        %1151 = vmatprep.subr.mxu0 0.0
        %1152 = vmatpush2.msra.mxu0 0.0
        %1153 = vmatprep.subr.mxu0 0.0
        %1154 = vmatpush2.msra.mxu0 0.0
        %1155 = vmatprep.subr.mxu0 0.0
        %1156 = vmatpush2.msra.mxu0 0.0
        %1157 = vmatprep.subr.mxu0 0.0
        %1158 = vmatpush2.msra.mxu0 0.0
        %1159 = vmatprep.subr.mxu0 0.0
        %1160 = vmatpush2.msra.mxu0 0.0
        %1161 = vmatprep.subr.mxu0 0.0
        %1162 = vmatpush2.msra.mxu0 0.0
        %1163 = vmatprep.mubr.f32.mxu0 0.0
        %1164 = vmatmul.mubr.f32.gmra.mxu0 %v1097
        %v1165 = vpop.f32.mrf.mxu0
        %v1166 = vadd.f32 0.0, %v1165
        %v1167 = vpop.f32.mrf.mxu0
        %1168 = vdwg.mxu0
        %v1170 = vsel %vm764, %v923, 0
        %1172 = vmatprep.subr.mxu0 0.0
        %1173 = vmatpush1.msra.mxu0 0.0
        %1174 = vmatprep.subr.mxu0 0.0
        %1175 = vmatpush1.msra.mxu0 0.0
        %1176 = vmatprep.subr.mxu0 0.0
        %1177 = vmatpush1.msra.mxu0 0.0
        %1178 = vmatprep.subr.mxu0 0.0
        %1179 = vmatpush1.msra.mxu0 0.0
        %1180 = vmatprep.subr.mxu0 0.0
        %1181 = vmatpush1.msra.mxu0 0.0
        %1182 = vmatprep.subr.mxu0 0.0
        %1183 = vmatpush1.msra.mxu0 0.0
        %1184 = vmatprep.subr.mxu0 0.0
        %1185 = vmatpush1.msra.mxu0 0.0
        %1186 = vmatprep.subr.mxu0 0.0
        %1187 = vmatpush1.msra.mxu0 0.0
        %1188 = vmatprep.subr.mxu0 0.0
        %1189 = vmatpush1.msra.mxu0 0.0
        %1190 = vmatprep.subr.mxu0 0.0
        %1191 = vmatpush1.msra.mxu0 0.0
        %1192 = vmatprep.subr.mxu0 0.0
        %1193 = vmatpush1.msra.mxu0 0.0
        %1194 = vmatprep.subr.mxu0 0.0
        %1195 = vmatpush1.msra.mxu0 0.0
        %1196 = vmatprep.subr.mxu0 0.0
        %1197 = vmatpush1.msra.mxu0 0.0
        %1198 = vmatprep.subr.mxu0 0.0
        %1199 = vmatpush1.msra.mxu0 0.0
        %1200 = vmatprep.subr.mxu0 0.0
        %1201 = vmatpush1.msra.mxu0 %v927
        %1202 = vmatprep.subr.mxu0 0.0
        %1203 = vmatpush1.msra.mxu0 %v926
        %1204 = vmatprep.subr.mxu0 0.0
        %1205 = vmatpush2.msra.mxu0 0.0
        %1206 = vmatprep.subr.mxu0 0.0
        %1207 = vmatpush2.msra.mxu0 0.0
        %1208 = vmatprep.subr.mxu0 0.0
        %1209 = vmatpush2.msra.mxu0 0.0
        %1210 = vmatprep.subr.mxu0 0.0
        %1211 = vmatpush2.msra.mxu0 0.0
        %1212 = vmatprep.subr.mxu0 0.0
        %1213 = vmatpush2.msra.mxu0 0.0
        %1214 = vmatprep.subr.mxu0 0.0
        %1215 = vmatpush2.msra.mxu0 0.0
        %1216 = vmatprep.subr.mxu0 0.0
        %1217 = vmatpush2.msra.mxu0 0.0
        %1218 = vmatprep.subr.mxu0 0.0
        %1219 = vmatpush2.msra.mxu0 0.0
        %1220 = vmatprep.subr.mxu0 0.0
        %1221 = vmatpush2.msra.mxu0 0.0
        %1222 = vmatprep.subr.mxu0 0.0
        %1223 = vmatpush2.msra.mxu0 0.0
        %1224 = vmatprep.subr.mxu0 0.0
        %1225 = vmatpush2.msra.mxu0 0.0
        %1226 = vmatprep.subr.mxu0 0.0
        %1227 = vmatpush2.msra.mxu0 0.0
        %1228 = vmatprep.subr.mxu0 0.0
        %1229 = vmatpush2.msra.mxu0 0.0
        %1230 = vmatprep.subr.mxu0 0.0
        %1231 = vmatpush2.msra.mxu0 0.0
        %1232 = vmatprep.subr.mxu0 0.0
        %1233 = vmatpush2.msra.mxu0 0.0
        %1234 = vmatprep.subr.mxu0 0.0
        %1235 = vmatpush2.msra.mxu0 0.0
        %1236 = vmatprep.mubr.f32.mxu0 0.0
        %1237 = vmatmul.mubr.f32.gmra.mxu0 %v1170
        %v1238 = vpop.f32.mrf.mxu0
        %v1239 = vadd.f32 %v1166, %v1238
        %v1240 = vpop.f32.mrf.mxu0
        %1241 = vdwg.mxu0
        %1242 = vrot.lane.b32.xlu0 %v763, 96
        %v1243 = vpop.permute.xlu0 %1242
        %1244 = vrot.lane.b32.xlu0 %v683, 96
        %v1245 = vpop.permute.xlu0 %1244
        %v1246 = vsel %vm764, %v1243, 0
        %v1248 = vsel %vm764, %v1245, 0
        %1250 = vmatprep.subr.mxu0 0.0
        %1251 = vmatpush1.xpose.msra.mxu0 0.0
        %1252 = vmatprep.subr.mxu0 0.0
        %1253 = vmatpush1.xpose.msra.mxu0 0.0
        %1254 = vmatprep.subr.mxu0 0.0
        %1255 = vmatpush1.xpose.msra.mxu0 0.0
        %1256 = vmatprep.subr.mxu0 0.0
        %1257 = vmatpush1.xpose.msra.mxu0 0.0
        %1258 = vmatprep.subr.mxu0 0.0
        %1259 = vmatpush1.xpose.msra.mxu0 0.0
        %1260 = vmatprep.subr.mxu0 0.0
        %1261 = vmatpush1.xpose.msra.mxu0 0.0
        %1262 = vmatprep.subr.mxu0 0.0
        %1263 = vmatpush1.xpose.msra.mxu0 0.0
        %1264 = vmatprep.subr.mxu0 0.0
        %1265 = vmatpush1.xpose.msra.mxu0 0.0
        %1266 = vmatprep.subr.mxu0 0.0
        %1267 = vmatpush1.xpose.msra.mxu0 0.0
        %1268 = vmatprep.subr.mxu0 0.0
        %1269 = vmatpush1.xpose.msra.mxu0 0.0
        %1270 = vmatprep.subr.mxu0 0.0
        %1271 = vmatpush1.xpose.msra.mxu0 0.0
        %1272 = vmatprep.subr.mxu0 0.0
        %1273 = vmatpush1.xpose.msra.mxu0 0.0
        %1274 = vmatprep.subr.mxu0 0.0
        %1275 = vmatpush1.xpose.msra.mxu0 0.0
        %1276 = vmatprep.subr.mxu0 0.0
        %1277 = vmatpush1.xpose.msra.mxu0 0.0
        %1278 = vmatprep.subr.mxu0 0.0
        %1279 = vmatpush1.xpose.msra.mxu0 0.0
        %1280 = vmatprep.subr.mxu0 0.0
        %1281 = vmatpush1.xpose.msra.mxu0 %v1248
        %1282 = vmatprep.subr.mxu0 0.0
        %1283 = vmatpush2.xpose.msra.mxu0 0.0
        %1284 = vmatprep.subr.mxu0 0.0
        %1285 = vmatpush2.xpose.msra.mxu0 0.0
        %1286 = vmatprep.subr.mxu0 0.0
        %1287 = vmatpush2.xpose.msra.mxu0 0.0
        %1288 = vmatprep.subr.mxu0 0.0
        %1289 = vmatpush2.xpose.msra.mxu0 0.0
        %1290 = vmatprep.subr.mxu0 0.0
        %1291 = vmatpush2.xpose.msra.mxu0 0.0
        %1292 = vmatprep.subr.mxu0 0.0
        %1293 = vmatpush2.xpose.msra.mxu0 0.0
        %1294 = vmatprep.subr.mxu0 0.0
        %1295 = vmatpush2.xpose.msra.mxu0 0.0
        %1296 = vmatprep.subr.mxu0 0.0
        %1297 = vmatpush2.xpose.msra.mxu0 0.0
        %1298 = vmatprep.subr.mxu0 0.0
        %1299 = vmatpush2.xpose.msra.mxu0 0.0
        %1300 = vmatprep.subr.mxu0 0.0
        %1301 = vmatpush2.xpose.msra.mxu0 0.0
        %1302 = vmatprep.subr.mxu0 0.0
        %1303 = vmatpush2.xpose.msra.mxu0 0.0
        %1304 = vmatprep.subr.mxu0 0.0
        %1305 = vmatpush2.xpose.msra.mxu0 0.0
        %1306 = vmatprep.subr.mxu0 0.0
        %1307 = vmatpush2.xpose.msra.mxu0 0.0
        %1308 = vmatprep.subr.mxu0 0.0
        %1309 = vmatpush2.xpose.msra.mxu0 0.0
        %1310 = vmatprep.subr.mxu0 0.0
        %1311 = vmatpush2.xpose.msra.mxu0 0.0
        %1312 = vmatprep.subr.mxu0 0.0
        %1313 = vmatpush2.xpose.msra.mxu0 0.0
        %1314 = vmatprep.mubr.f32.mxu0 0.0
        %1315 = vmatmul.mubr.f32.gmra.mxu0 %v1246
        %v1316 = vpop.f32.mrf.mxu0
        %v1317 = vadd.f32 0.0, %v1316
        %v1318 = vpop.f32.mrf.mxu0
        %1319 = vdwg.mxu0
        %v1320 = vsel %vm841, %v1317, -inf
        %1321 = vmax.xlane.f32.xlu0 %v1320
        %v1322 = vpop.xlane.xlu0 %1321
        %v1323 = vsub.f32 %v1317, %v1322
        %v1324 = vmul.f32 %v1323, 1.442695
        %v1325 = vpow.pop %v1324
        %v1326 = vsel %vm841, %v1325, 0.0
        %1327 = vadd.xlane.f32.xlu0 %v1326
        %v1328 = vpop.xlane.xlu0 %1327
        %v1329 = vrcp.pop %v1328
        %v1330 = vmul.f32 %v1325, %v1329
        %1331 = vrot.lane.b32.xlu0 %v760, 96
        %v1332 = vpop.permute.xlu0 %1331
        %v1335 = vsel %vm841, %v1330, 0
        %1337 = vmatprep.subr.mxu0 0.0
        %1338 = vmatpush1.msra.mxu0 0.0
        %1339 = vmatprep.subr.mxu0 0.0
        %1340 = vmatpush1.msra.mxu0 0.0
        %1341 = vmatprep.subr.mxu0 0.0
        %1342 = vmatpush1.msra.mxu0 0.0
        %1343 = vmatprep.subr.mxu0 0.0
        %1344 = vmatpush1.msra.mxu0 0.0
        %1345 = vmatprep.subr.mxu0 0.0
        %1346 = vmatpush1.msra.mxu0 0.0
        %1347 = vmatprep.subr.mxu0 0.0
        %1348 = vmatpush1.msra.mxu0 0.0
        %1349 = vmatprep.subr.mxu0 0.0
        %1350 = vmatpush1.msra.mxu0 0.0
        %1351 = vmatprep.subr.mxu0 0.0
        %1352 = vmatpush1.msra.mxu0 0.0
        %1353 = vmatprep.subr.mxu0 0.0
        %1354 = vmatpush1.msra.mxu0 0.0
        %1355 = vmatprep.subr.mxu0 0.0
        %1356 = vmatpush1.msra.mxu0 0.0
        %1357 = vmatprep.subr.mxu0 0.0
        %1358 = vmatpush1.msra.mxu0 0.0
        %1359 = vmatprep.subr.mxu0 0.0
        %1360 = vmatpush1.msra.mxu0 0.0
        %1361 = vmatprep.subr.mxu0 0.0
        %1362 = vmatpush1.msra.mxu0 0.0
        %1363 = vmatprep.subr.mxu0 0.0
        %1364 = vmatpush1.msra.mxu0 0.0
        %1365 = vmatprep.subr.mxu0 0.0
        %1366 = vmatpush1.msra.mxu0 0.0
        %1367 = vmatprep.subr.mxu0 0.0
        %1368 = vmatpush1.msra.mxu0 %v1332
        %1369 = vmatprep.subr.mxu0 0.0
        %1370 = vmatpush2.msra.mxu0 0.0
        %1371 = vmatprep.subr.mxu0 0.0
        %1372 = vmatpush2.msra.mxu0 0.0
        %1373 = vmatprep.subr.mxu0 0.0
        %1374 = vmatpush2.msra.mxu0 0.0
        %1375 = vmatprep.subr.mxu0 0.0
        %1376 = vmatpush2.msra.mxu0 0.0
        %1377 = vmatprep.subr.mxu0 0.0
        %1378 = vmatpush2.msra.mxu0 0.0
        %1379 = vmatprep.subr.mxu0 0.0
        %1380 = vmatpush2.msra.mxu0 0.0
        %1381 = vmatprep.subr.mxu0 0.0
        %1382 = vmatpush2.msra.mxu0 0.0
        %1383 = vmatprep.subr.mxu0 0.0
        %1384 = vmatpush2.msra.mxu0 0.0
        %1385 = vmatprep.subr.mxu0 0.0
        %1386 = vmatpush2.msra.mxu0 0.0
        %1387 = vmatprep.subr.mxu0 0.0
        %1388 = vmatpush2.msra.mxu0 0.0
        %1389 = vmatprep.subr.mxu0 0.0
        %1390 = vmatpush2.msra.mxu0 0.0
        %1391 = vmatprep.subr.mxu0 0.0
        %1392 = vmatpush2.msra.mxu0 0.0
        %1393 = vmatprep.subr.mxu0 0.0
        %1394 = vmatpush2.msra.mxu0 0.0
        %1395 = vmatprep.subr.mxu0 0.0
        %1396 = vmatpush2.msra.mxu0 0.0
        %1397 = vmatprep.subr.mxu0 0.0
        %1398 = vmatpush2.msra.mxu0 0.0
        %1399 = vmatprep.subr.mxu0 0.0
        %1400 = vmatpush2.msra.mxu0 0.0
        %1401 = vmatprep.mubr.f32.mxu0 0.0
        %1402 = vmatmul.mubr.f32.gmra.mxu0 %v1335
        %v1403 = vpop.f32.mrf.mxu0
        %v1404 = vadd.f32 0.0, %v1403
        %v1405 = vpop.f32.mrf.mxu0
        %1406 = vdwg.mxu0
        %v1407 = vld [vmem:[%s6 + $0x20] sm:$0xff]
        %v1408 = vld [vmem:[%s6 + $0x28] sm:$0xff]
        %v1410 = vsel %vm764, %v1404, 0
        %1412 = vmatprep.subr.mxu0 0.0
        %1413 = vmatpush1.msra.mxu0 0.0
        %1414 = vmatprep.subr.mxu0 0.0
        %1415 = vmatpush1.msra.mxu0 0.0
        %1416 = vmatprep.subr.mxu0 0.0
        %1417 = vmatpush1.msra.mxu0 0.0
        %1418 = vmatprep.subr.mxu0 0.0
        %1419 = vmatpush1.msra.mxu0 0.0
        %1420 = vmatprep.subr.mxu0 0.0
        %1421 = vmatpush1.msra.mxu0 0.0
        %1422 = vmatprep.subr.mxu0 0.0
        %1423 = vmatpush1.msra.mxu0 0.0
        %1424 = vmatprep.subr.mxu0 0.0
        %1425 = vmatpush1.msra.mxu0 0.0
        %1426 = vmatprep.subr.mxu0 0.0
        %1427 = vmatpush1.msra.mxu0 0.0
        %1428 = vmatprep.subr.mxu0 0.0
        %1429 = vmatpush1.msra.mxu0 0.0
        %1430 = vmatprep.subr.mxu0 0.0
        %1431 = vmatpush1.msra.mxu0 0.0
        %1432 = vmatprep.subr.mxu0 0.0
        %1433 = vmatpush1.msra.mxu0 0.0
        %1434 = vmatprep.subr.mxu0 0.0
        %1435 = vmatpush1.msra.mxu0 0.0
        %1436 = vmatprep.subr.mxu0 0.0
        %1437 = vmatpush1.msra.mxu0 0.0
        %1438 = vmatprep.subr.mxu0 0.0
        %1439 = vmatpush1.msra.mxu0 0.0
        %1440 = vmatprep.subr.mxu0 0.0
        %1441 = vmatpush1.msra.mxu0 %v1408
        %1442 = vmatprep.subr.mxu0 0.0
        %1443 = vmatpush1.msra.mxu0 %v1407
        %1444 = vmatprep.subr.mxu0 0.0
        %1445 = vmatpush2.msra.mxu0 0.0
        %1446 = vmatprep.subr.mxu0 0.0
        %1447 = vmatpush2.msra.mxu0 0.0
        %1448 = vmatprep.subr.mxu0 0.0
        %1449 = vmatpush2.msra.mxu0 0.0
        %1450 = vmatprep.subr.mxu0 0.0
        %1451 = vmatpush2.msra.mxu0 0.0
        %1452 = vmatprep.subr.mxu0 0.0
        %1453 = vmatpush2.msra.mxu0 0.0
        %1454 = vmatprep.subr.mxu0 0.0
        %1455 = vmatpush2.msra.mxu0 0.0
        %1456 = vmatprep.subr.mxu0 0.0
        %1457 = vmatpush2.msra.mxu0 0.0
        %1458 = vmatprep.subr.mxu0 0.0
        %1459 = vmatpush2.msra.mxu0 0.0
        %1460 = vmatprep.subr.mxu0 0.0
        %1461 = vmatpush2.msra.mxu0 0.0
        %1462 = vmatprep.subr.mxu0 0.0
        %1463 = vmatpush2.msra.mxu0 0.0
        %1464 = vmatprep.subr.mxu0 0.0
        %1465 = vmatpush2.msra.mxu0 0.0
        %1466 = vmatprep.subr.mxu0 0.0
        %1467 = vmatpush2.msra.mxu0 0.0
        %1468 = vmatprep.subr.mxu0 0.0
        %1469 = vmatpush2.msra.mxu0 0.0
        %1470 = vmatprep.subr.mxu0 0.0
        %1471 = vmatpush2.msra.mxu0 0.0
        %1472 = vmatprep.subr.mxu0 0.0
        %1473 = vmatpush2.msra.mxu0 0.0
        %1474 = vmatprep.subr.mxu0 0.0
        %1475 = vmatpush2.msra.mxu0 0.0
        %1476 = vmatprep.mubr.f32.mxu0 0.0
        %1477 = vmatmul.mubr.f32.gmra.mxu0 %v1410
        %v1478 = vpop.f32.mrf.mxu0
        %v1479 = vadd.f32 0.0, %v1478
        %v1480 = vpop.f32.mrf.mxu0
        %1481 = vdwg.mxu0
        %v1482 = vadd.f32 %v1239, %v1479
        %1483 = vrot.lane.b32.xlu0 %v763, 80
        %v1484 = vpop.permute.xlu0 %1483
        %1485 = vrot.lane.b32.xlu0 %v683, 80
        %v1486 = vpop.permute.xlu0 %1485
        %v1487 = vsel %vm764, %v1484, 0
        %v1489 = vsel %vm764, %v1486, 0
        %1491 = vmatprep.subr.mxu0 0.0
        %1492 = vmatpush1.xpose.msra.mxu0 0.0
        %1493 = vmatprep.subr.mxu0 0.0
        %1494 = vmatpush1.xpose.msra.mxu0 0.0
        %1495 = vmatprep.subr.mxu0 0.0
        %1496 = vmatpush1.xpose.msra.mxu0 0.0
        %1497 = vmatprep.subr.mxu0 0.0
        %1498 = vmatpush1.xpose.msra.mxu0 0.0
        %1499 = vmatprep.subr.mxu0 0.0
        %1500 = vmatpush1.xpose.msra.mxu0 0.0
        %1501 = vmatprep.subr.mxu0 0.0
        %1502 = vmatpush1.xpose.msra.mxu0 0.0
        %1503 = vmatprep.subr.mxu0 0.0
        %1504 = vmatpush1.xpose.msra.mxu0 0.0
        %1505 = vmatprep.subr.mxu0 0.0
        %1506 = vmatpush1.xpose.msra.mxu0 0.0
        %1507 = vmatprep.subr.mxu0 0.0
        %1508 = vmatpush1.xpose.msra.mxu0 0.0
        %1509 = vmatprep.subr.mxu0 0.0
        %1510 = vmatpush1.xpose.msra.mxu0 0.0
        %1511 = vmatprep.subr.mxu0 0.0
        %1512 = vmatpush1.xpose.msra.mxu0 0.0
        %1513 = vmatprep.subr.mxu0 0.0
        %1514 = vmatpush1.xpose.msra.mxu0 0.0
        %1515 = vmatprep.subr.mxu0 0.0
        %1516 = vmatpush1.xpose.msra.mxu0 0.0
        %1517 = vmatprep.subr.mxu0 0.0
        %1518 = vmatpush1.xpose.msra.mxu0 0.0
        %1519 = vmatprep.subr.mxu0 0.0
        %1520 = vmatpush1.xpose.msra.mxu0 0.0
        %1521 = vmatprep.subr.mxu0 0.0
        %1522 = vmatpush1.xpose.msra.mxu0 %v1489
        %1523 = vmatprep.subr.mxu0 0.0
        %1524 = vmatpush2.xpose.msra.mxu0 0.0
        %1525 = vmatprep.subr.mxu0 0.0
        %1526 = vmatpush2.xpose.msra.mxu0 0.0
        %1527 = vmatprep.subr.mxu0 0.0
        %1528 = vmatpush2.xpose.msra.mxu0 0.0
        %1529 = vmatprep.subr.mxu0 0.0
        %1530 = vmatpush2.xpose.msra.mxu0 0.0
        %1531 = vmatprep.subr.mxu0 0.0
        %1532 = vmatpush2.xpose.msra.mxu0 0.0
        %1533 = vmatprep.subr.mxu0 0.0
        %1534 = vmatpush2.xpose.msra.mxu0 0.0
        %1535 = vmatprep.subr.mxu0 0.0
        %1536 = vmatpush2.xpose.msra.mxu0 0.0
        %1537 = vmatprep.subr.mxu0 0.0
        %1538 = vmatpush2.xpose.msra.mxu0 0.0
        %1539 = vmatprep.subr.mxu0 0.0
        %1540 = vmatpush2.xpose.msra.mxu0 0.0
        %1541 = vmatprep.subr.mxu0 0.0
        %1542 = vmatpush2.xpose.msra.mxu0 0.0
        %1543 = vmatprep.subr.mxu0 0.0
        %1544 = vmatpush2.xpose.msra.mxu0 0.0
        %1545 = vmatprep.subr.mxu0 0.0
        %1546 = vmatpush2.xpose.msra.mxu0 0.0
        %1547 = vmatprep.subr.mxu0 0.0
        %1548 = vmatpush2.xpose.msra.mxu0 0.0
        %1549 = vmatprep.subr.mxu0 0.0
        %1550 = vmatpush2.xpose.msra.mxu0 0.0
        %1551 = vmatprep.subr.mxu0 0.0
        %1552 = vmatpush2.xpose.msra.mxu0 0.0
        %1553 = vmatprep.subr.mxu0 0.0
        %1554 = vmatpush2.xpose.msra.mxu0 0.0
        %1555 = vmatprep.mubr.f32.mxu0 0.0
        %1556 = vmatmul.mubr.f32.gmra.mxu0 %v1487
        %v1557 = vpop.f32.mrf.mxu0
        %v1558 = vadd.f32 0.0, %v1557
        %v1559 = vpop.f32.mrf.mxu0
        %1560 = vdwg.mxu0
        %v1561 = vsel %vm841, %v1558, -inf
        %1562 = vmax.xlane.f32.xlu0 %v1561
        %v1563 = vpop.xlane.xlu0 %1562
        %v1564 = vsub.f32 %v1558, %v1563
        %v1565 = vmul.f32 %v1564, 1.442695
        %v1566 = vpow.pop %v1565
        %v1567 = vsel %vm841, %v1566, 0.0
        %1568 = vadd.xlane.f32.xlu0 %v1567
        %v1569 = vpop.xlane.xlu0 %1568
        %v1570 = vrcp.pop %v1569
        %v1571 = vmul.f32 %v1566, %v1570
        %1572 = vrot.lane.b32.xlu0 %v760, 80
        %v1573 = vpop.permute.xlu0 %1572
        %v1576 = vsel %vm841, %v1571, 0
        %1578 = vmatprep.subr.mxu0 0.0
        %1579 = vmatpush1.msra.mxu0 0.0
        %1580 = vmatprep.subr.mxu0 0.0
        %1581 = vmatpush1.msra.mxu0 0.0
        %1582 = vmatprep.subr.mxu0 0.0
        %1583 = vmatpush1.msra.mxu0 0.0
        %1584 = vmatprep.subr.mxu0 0.0
        %1585 = vmatpush1.msra.mxu0 0.0
        %1586 = vmatprep.subr.mxu0 0.0
        %1587 = vmatpush1.msra.mxu0 0.0
        %1588 = vmatprep.subr.mxu0 0.0
        %1589 = vmatpush1.msra.mxu0 0.0
        %1590 = vmatprep.subr.mxu0 0.0
        %1591 = vmatpush1.msra.mxu0 0.0
        %1592 = vmatprep.subr.mxu0 0.0
        %1593 = vmatpush1.msra.mxu0 0.0
        %1594 = vmatprep.subr.mxu0 0.0
        %1595 = vmatpush1.msra.mxu0 0.0
        %1596 = vmatprep.subr.mxu0 0.0
        %1597 = vmatpush1.msra.mxu0 0.0
        %1598 = vmatprep.subr.mxu0 0.0
        %1599 = vmatpush1.msra.mxu0 0.0
        %1600 = vmatprep.subr.mxu0 0.0
        %1601 = vmatpush1.msra.mxu0 0.0
        %1602 = vmatprep.subr.mxu0 0.0
        %1603 = vmatpush1.msra.mxu0 0.0
        %1604 = vmatprep.subr.mxu0 0.0
        %1605 = vmatpush1.msra.mxu0 0.0
        %1606 = vmatprep.subr.mxu0 0.0
        %1607 = vmatpush1.msra.mxu0 0.0
        %1608 = vmatprep.subr.mxu0 0.0
        %1609 = vmatpush1.msra.mxu0 %v1573
        %1610 = vmatprep.subr.mxu0 0.0
        %1611 = vmatpush2.msra.mxu0 0.0
        %1612 = vmatprep.subr.mxu0 0.0
        %1613 = vmatpush2.msra.mxu0 0.0
        %1614 = vmatprep.subr.mxu0 0.0
        %1615 = vmatpush2.msra.mxu0 0.0
        %1616 = vmatprep.subr.mxu0 0.0
        %1617 = vmatpush2.msra.mxu0 0.0
        %1618 = vmatprep.subr.mxu0 0.0
        %1619 = vmatpush2.msra.mxu0 0.0
        %1620 = vmatprep.subr.mxu0 0.0
        %1621 = vmatpush2.msra.mxu0 0.0
        %1622 = vmatprep.subr.mxu0 0.0
        %1623 = vmatpush2.msra.mxu0 0.0
        %1624 = vmatprep.subr.mxu0 0.0
        %1625 = vmatpush2.msra.mxu0 0.0
        %1626 = vmatprep.subr.mxu0 0.0
        %1627 = vmatpush2.msra.mxu0 0.0
        %1628 = vmatprep.subr.mxu0 0.0
        %1629 = vmatpush2.msra.mxu0 0.0
        %1630 = vmatprep.subr.mxu0 0.0
        %1631 = vmatpush2.msra.mxu0 0.0
        %1632 = vmatprep.subr.mxu0 0.0
        %1633 = vmatpush2.msra.mxu0 0.0
        %1634 = vmatprep.subr.mxu0 0.0
        %1635 = vmatpush2.msra.mxu0 0.0
        %1636 = vmatprep.subr.mxu0 0.0
        %1637 = vmatpush2.msra.mxu0 0.0
        %1638 = vmatprep.subr.mxu0 0.0
        %1639 = vmatpush2.msra.mxu0 0.0
        %1640 = vmatprep.subr.mxu0 0.0
        %1641 = vmatpush2.msra.mxu0 0.0
        %1642 = vmatprep.mubr.f32.mxu0 0.0
        %1643 = vmatmul.mubr.f32.gmra.mxu0 %v1576
        %v1644 = vpop.f32.mrf.mxu0
        %v1645 = vadd.f32 0.0, %v1644
        %v1646 = vpop.f32.mrf.mxu0
        %1647 = vdwg.mxu0
        %v1648 = vld [vmem:[%s6 + $0x30] sm:$0xff]
        %v1649 = vld [vmem:[%s6 + $0x38] sm:$0xff]
        %v1651 = vsel %vm764, %v1645, 0
        %1653 = vmatprep.subr.mxu0 0.0
        %1654 = vmatpush1.msra.mxu0 0.0
        %1655 = vmatprep.subr.mxu0 0.0
        %1656 = vmatpush1.msra.mxu0 0.0
        %1657 = vmatprep.subr.mxu0 0.0
        %1658 = vmatpush1.msra.mxu0 0.0
        %1659 = vmatprep.subr.mxu0 0.0
        %1660 = vmatpush1.msra.mxu0 0.0
        %1661 = vmatprep.subr.mxu0 0.0
        %1662 = vmatpush1.msra.mxu0 0.0
        %1663 = vmatprep.subr.mxu0 0.0
        %1664 = vmatpush1.msra.mxu0 0.0
        %1665 = vmatprep.subr.mxu0 0.0
        %1666 = vmatpush1.msra.mxu0 0.0
        %1667 = vmatprep.subr.mxu0 0.0
        %1668 = vmatpush1.msra.mxu0 0.0
        %1669 = vmatprep.subr.mxu0 0.0
        %1670 = vmatpush1.msra.mxu0 0.0
        %1671 = vmatprep.subr.mxu0 0.0
        %1672 = vmatpush1.msra.mxu0 0.0
        %1673 = vmatprep.subr.mxu0 0.0
        %1674 = vmatpush1.msra.mxu0 0.0
        %1675 = vmatprep.subr.mxu0 0.0
        %1676 = vmatpush1.msra.mxu0 0.0
        %1677 = vmatprep.subr.mxu0 0.0
        %1678 = vmatpush1.msra.mxu0 0.0
        %1679 = vmatprep.subr.mxu0 0.0
        %1680 = vmatpush1.msra.mxu0 0.0
        %1681 = vmatprep.subr.mxu0 0.0
        %1682 = vmatpush1.msra.mxu0 %v1649
        %1683 = vmatprep.subr.mxu0 0.0
        %1684 = vmatpush1.msra.mxu0 %v1648
        %1685 = vmatprep.subr.mxu0 0.0
        %1686 = vmatpush2.msra.mxu0 0.0
        %1687 = vmatprep.subr.mxu0 0.0
        %1688 = vmatpush2.msra.mxu0 0.0
        %1689 = vmatprep.subr.mxu0 0.0
        %1690 = vmatpush2.msra.mxu0 0.0
        %1691 = vmatprep.subr.mxu0 0.0
        %1692 = vmatpush2.msra.mxu0 0.0
        %1693 = vmatprep.subr.mxu0 0.0
        %1694 = vmatpush2.msra.mxu0 0.0
        %1695 = vmatprep.subr.mxu0 0.0
        %1696 = vmatpush2.msra.mxu0 0.0
        %1697 = vmatprep.subr.mxu0 0.0
        %1698 = vmatpush2.msra.mxu0 0.0
        %1699 = vmatprep.subr.mxu0 0.0
        %1700 = vmatpush2.msra.mxu0 0.0
        %1701 = vmatprep.subr.mxu0 0.0
        %1702 = vmatpush2.msra.mxu0 0.0
        %1703 = vmatprep.subr.mxu0 0.0
        %1704 = vmatpush2.msra.mxu0 0.0
        %1705 = vmatprep.subr.mxu0 0.0
        %1706 = vmatpush2.msra.mxu0 0.0
        %1707 = vmatprep.subr.mxu0 0.0
        %1708 = vmatpush2.msra.mxu0 0.0
        %1709 = vmatprep.subr.mxu0 0.0
        %1710 = vmatpush2.msra.mxu0 0.0
        %1711 = vmatprep.subr.mxu0 0.0
        %1712 = vmatpush2.msra.mxu0 0.0
        %1713 = vmatprep.subr.mxu0 0.0
        %1714 = vmatpush2.msra.mxu0 0.0
        %1715 = vmatprep.subr.mxu0 0.0
        %1716 = vmatpush2.msra.mxu0 0.0
        %1717 = vmatprep.mubr.f32.mxu0 0.0
        %1718 = vmatmul.mubr.f32.gmra.mxu0 %v1651
        %v1719 = vpop.f32.mrf.mxu0
        %v1720 = vadd.f32 0.0, %v1719
        %v1721 = vpop.f32.mrf.mxu0
        %1722 = vdwg.mxu0
        %v1723 = vadd.f32 %v1482, %v1720
        %1724 = vst.msk [vmem:[%s519] sm:$0xff] %vm841, %v852
        %1725 = vst.msk [vmem:[%s519 + $0x8] sm:$0xff] %vm841, %v1016
        %1726 = vst.msk [vmem:[%s519 + $0x10] sm:$0xff] %vm841, %v1330
        %1727 = vst.msk [vmem:[%s519 + $0x18] sm:$0xff] %vm841, %v1571
        %v1728 = vadd.f32 %v1723, %v530
        %v1729 = vld [vmem:[%s7] sm:$0x1]
        %v1730 = vld [vmem:[%s8] sm:$0x1]
        %v1731 = vsel %vm535, %v1728, 0.0
        %1732 = vadd.xlane.f32.xlu0 %v1731
        %v1733 = vpop.xlane.xlu0 %1732
        %v1734 = vrcp.pop 32.0
        %v1735 = vmul.f32 %v1733, %v1734
        %v1736 = vsub.f32 %v1728, %v1735
        %v1737 = vmul.f32 %v1736, %v1736
        %v1738 = vsel %vm535, %v1737, 0.0
        %1739 = vadd.xlane.f32.xlu0 %v1738
        %v1740 = vpop.xlane.xlu0 %1739
        %v1741 = vmul.f32 %v1740, %v1734
        %v1742 = vadd.f32 %v1741, 1e-05
        %v1743 = vrsqrt.pop %v1742
        %v1744 = vmul.f32 %v1736, %v1743
        %v1746 = vlaneseq
        %v1747 = vshrl.u32 %v1746, 7
        %v1748 = vsub.s32 0, %v1747
        %v1749 = vrot.slane %v1729, %v1748
        %v1751 = vmul.f32 %v1744, %v1749
        %v1753 = vlaneseq
        %v1754 = vshrl.u32 %v1753, 7
        %v1755 = vsub.s32 0, %v1754
        %v1756 = vrot.slane %v1730, %v1755
        %v1758 = vadd.f32 %v1751, %v1756
        %v1759 = vld [vmem:[%s9] sm:$0xff]
        %v1760 = vld [vmem:[%s9 + $0x8] sm:$0xff]
        %v1761 = vld [vmem:[%s9 + $0x10] sm:$0xff]
        %v1762 = vld [vmem:[%s9 + $0x18] sm:$0xff]
        %v1764 = vsel %vm535, %v1758, 0
        %1766 = vmatprep.subr.mxu0 0.0
        %1767 = vmatpush1.msra.mxu0 0.0
        %1768 = vmatprep.subr.mxu0 0.0
        %1769 = vmatpush1.msra.mxu0 0.0
        %1770 = vmatprep.subr.mxu0 0.0
        %1771 = vmatpush1.msra.mxu0 0.0
        %1772 = vmatprep.subr.mxu0 0.0
        %1773 = vmatpush1.msra.mxu0 0.0
        %1774 = vmatprep.subr.mxu0 0.0
        %1775 = vmatpush1.msra.mxu0 0.0
        %1776 = vmatprep.subr.mxu0 0.0
        %1777 = vmatpush1.msra.mxu0 0.0
        %1778 = vmatprep.subr.mxu0 0.0
        %1779 = vmatpush1.msra.mxu0 0.0
        %1780 = vmatprep.subr.mxu0 0.0
        %1781 = vmatpush1.msra.mxu0 0.0
        %1782 = vmatprep.subr.mxu0 0.0
        %1783 = vmatpush1.msra.mxu0 0.0
        %1784 = vmatprep.subr.mxu0 0.0
        %1785 = vmatpush1.msra.mxu0 0.0
        %1786 = vmatprep.subr.mxu0 0.0
        %1787 = vmatpush1.msra.mxu0 0.0
        %1788 = vmatprep.subr.mxu0 0.0
        %1789 = vmatpush1.msra.mxu0 0.0
        %1790 = vmatprep.subr.mxu0 0.0
        %1791 = vmatpush1.msra.mxu0 %v1762
        %1792 = vmatprep.subr.mxu0 0.0
        %1793 = vmatpush1.msra.mxu0 %v1761
        %1794 = vmatprep.subr.mxu0 0.0
        %1795 = vmatpush1.msra.mxu0 %v1760
        %1796 = vmatprep.subr.mxu0 0.0
        %1797 = vmatpush1.msra.mxu0 %v1759
        %1798 = vmatprep.subr.mxu0 0.0
        %1799 = vmatpush2.msra.mxu0 0.0
        %1800 = vmatprep.subr.mxu0 0.0
        %1801 = vmatpush2.msra.mxu0 0.0
        %1802 = vmatprep.subr.mxu0 0.0
        %1803 = vmatpush2.msra.mxu0 0.0
        %1804 = vmatprep.subr.mxu0 0.0
        %1805 = vmatpush2.msra.mxu0 0.0
        %1806 = vmatprep.subr.mxu0 0.0
        %1807 = vmatpush2.msra.mxu0 0.0
        %1808 = vmatprep.subr.mxu0 0.0
        %1809 = vmatpush2.msra.mxu0 0.0
        %1810 = vmatprep.subr.mxu0 0.0
        %1811 = vmatpush2.msra.mxu0 0.0
        %1812 = vmatprep.subr.mxu0 0.0
        %1813 = vmatpush2.msra.mxu0 0.0
        %1814 = vmatprep.subr.mxu0 0.0
        %1815 = vmatpush2.msra.mxu0 0.0
        %1816 = vmatprep.subr.mxu0 0.0
        %1817 = vmatpush2.msra.mxu0 0.0
        %1818 = vmatprep.subr.mxu0 0.0
        %1819 = vmatpush2.msra.mxu0 0.0
        %1820 = vmatprep.subr.mxu0 0.0
        %1821 = vmatpush2.msra.mxu0 0.0
        %1822 = vmatprep.subr.mxu0 0.0
        %1823 = vmatpush2.msra.mxu0 0.0
        %1824 = vmatprep.subr.mxu0 0.0
        %1825 = vmatpush2.msra.mxu0 0.0
        %1826 = vmatprep.subr.mxu0 0.0
        %1827 = vmatpush2.msra.mxu0 0.0
        %1828 = vmatprep.subr.mxu0 0.0
        %1829 = vmatpush2.msra.mxu0 0.0
        %1830 = vmatprep.mubr.f32.mxu0 0.0
        %1831 = vmatmul.mubr.f32.gmra.mxu0 %v1764
        %v1832 = vpop.f32.mrf.mxu0
        %v1833 = vadd.f32 0.0, %v1832
        %v1834 = vpop.f32.mrf.mxu0
        %1835 = vdwg.mxu0
        %v1836 = vmax.f32 %v1833, 0.0
        %v1837 = vld [vmem:[%s10] sm:$0xff]
        %v1838 = vld [vmem:[%s10 + $0x8] sm:$0xff]
        %v1839 = vld [vmem:[%s10 + $0x10] sm:$0xff]
        %v1840 = vld [vmem:[%s10 + $0x18] sm:$0xff]
        %v1841 = vld [vmem:[%s10 + $0x20] sm:$0xff]
        %v1842 = vld [vmem:[%s10 + $0x28] sm:$0xff]
        %v1843 = vld [vmem:[%s10 + $0x30] sm:$0xff]
        %v1844 = vld [vmem:[%s10 + $0x38] sm:$0xff]
        %vm1845 = vcmask 523264
        %v1847 = vsel %vm1845, %v1836, 0
        %1849 = vmatprep.subr.mxu0 0.0
        %1850 = vmatpush1.msra.mxu0 0.0
        %1851 = vmatprep.subr.mxu0 0.0
        %1852 = vmatpush1.msra.mxu0 0.0
        %1853 = vmatprep.subr.mxu0 0.0
        %1854 = vmatpush1.msra.mxu0 0.0
        %1855 = vmatprep.subr.mxu0 0.0
        %1856 = vmatpush1.msra.mxu0 0.0
        %1857 = vmatprep.subr.mxu0 0.0
        %1858 = vmatpush1.msra.mxu0 0.0
        %1859 = vmatprep.subr.mxu0 0.0
        %1860 = vmatpush1.msra.mxu0 0.0
        %1861 = vmatprep.subr.mxu0 0.0
        %1862 = vmatpush1.msra.mxu0 0.0
        %1863 = vmatprep.subr.mxu0 0.0
        %1864 = vmatpush1.msra.mxu0 0.0
        %1865 = vmatprep.subr.mxu0 0.0
        %1866 = vmatpush1.msra.mxu0 %v1844
        %1867 = vmatprep.subr.mxu0 0.0
        %1868 = vmatpush1.msra.mxu0 %v1843
        %1869 = vmatprep.subr.mxu0 0.0
        %1870 = vmatpush1.msra.mxu0 %v1842
        %1871 = vmatprep.subr.mxu0 0.0
        %1872 = vmatpush1.msra.mxu0 %v1841
        %1873 = vmatprep.subr.mxu0 0.0
        %1874 = vmatpush1.msra.mxu0 %v1840
        %1875 = vmatprep.subr.mxu0 0.0
        %1876 = vmatpush1.msra.mxu0 %v1839
        %1877 = vmatprep.subr.mxu0 0.0
        %1878 = vmatpush1.msra.mxu0 %v1838
        %1879 = vmatprep.subr.mxu0 0.0
        %1880 = vmatpush1.msra.mxu0 %v1837
        %1881 = vmatprep.subr.mxu0 0.0
        %1882 = vmatpush2.msra.mxu0 0.0
        %1883 = vmatprep.subr.mxu0 0.0
        %1884 = vmatpush2.msra.mxu0 0.0
        %1885 = vmatprep.subr.mxu0 0.0
        %1886 = vmatpush2.msra.mxu0 0.0
        %1887 = vmatprep.subr.mxu0 0.0
        %1888 = vmatpush2.msra.mxu0 0.0
        %1889 = vmatprep.subr.mxu0 0.0
        %1890 = vmatpush2.msra.mxu0 0.0
        %1891 = vmatprep.subr.mxu0 0.0
        %1892 = vmatpush2.msra.mxu0 0.0
        %1893 = vmatprep.subr.mxu0 0.0
        %1894 = vmatpush2.msra.mxu0 0.0
        %1895 = vmatprep.subr.mxu0 0.0
        %1896 = vmatpush2.msra.mxu0 0.0
        %1897 = vmatprep.subr.mxu0 0.0
        %1898 = vmatpush2.msra.mxu0 0.0
        %1899 = vmatprep.subr.mxu0 0.0
        %1900 = vmatpush2.msra.mxu0 0.0
        %1901 = vmatprep.subr.mxu0 0.0
        %1902 = vmatpush2.msra.mxu0 0.0
        %1903 = vmatprep.subr.mxu0 0.0
        %1904 = vmatpush2.msra.mxu0 0.0
        %1905 = vmatprep.subr.mxu0 0.0
        %1906 = vmatpush2.msra.mxu0 0.0
        %1907 = vmatprep.subr.mxu0 0.0
        %1908 = vmatpush2.msra.mxu0 0.0
        %1909 = vmatprep.subr.mxu0 0.0
        %1910 = vmatpush2.msra.mxu0 0.0
        %1911 = vmatprep.subr.mxu0 0.0
        %1912 = vmatpush2.msra.mxu0 0.0
        %1913 = vmatprep.mubr.f32.mxu0 0.0
        %1914 = vmatmul.mubr.f32.gmra.mxu0 %v1847
        %v1915 = vpop.f32.mrf.mxu0
        %v1916 = vadd.f32 %v1758, %v1915
        %v1917 = vpop.f32.mrf.mxu0
        %1918 = vdwg.mxu0
        %v1919 = vld [vmem:[%s11] sm:$0x1]
        %v1920 = vld [vmem:[%s12] sm:$0x1]
        %v1921 = vsel %vm535, %v1916, 0.0
        %1922 = vadd.xlane.f32.xlu0 %v1921
        %v1923 = vpop.xlane.xlu0 %1922
        %v1924 = vmul.f32 %v1923, %v1734
        %v1925 = vsub.f32 %v1916, %v1924
        %v1926 = vmul.f32 %v1925, %v1925
        %v1927 = vsel %vm535, %v1926, 0.0
        %1928 = vadd.xlane.f32.xlu0 %v1927
        %v1929 = vpop.xlane.xlu0 %1928
        %v1930 = vmul.f32 %v1929, %v1734
        %v1931 = vadd.f32 %v1930, 1e-05
        %v1932 = vrsqrt.pop %v1931
        %v1933 = vmul.f32 %v1925, %v1932
        %v1935 = vlaneseq
        %v1936 = vshrl.u32 %v1935, 7
        %v1937 = vsub.s32 0, %v1936
        %v1938 = vrot.slane %v1919, %v1937
        %v1940 = vmul.f32 %v1933, %v1938
        %v1942 = vlaneseq
        %v1943 = vshrl.u32 %v1942, 7
        %v1944 = vsub.s32 0, %v1943
        %v1945 = vrot.slane %v1920, %v1944
        %v1947 = vadd.f32 %v1940, %v1945
        %1948 = vst.msk [vmem:[%s512] sm:$0xff] %vm535, %v1947
        %s1949 = sand.u32 %s331, 1
        %s1950 = scalar_lea.sflag [#allocation4], %s1949
        %s1951 = sand.u32 %s331, 1
        %s1952 = smul.addr %s1951, 8
        %s1953 = scalar_lea.vmem [#allocation5], %s1952
        %s1954 = sand.u32 %s357, 1
        %s1955 = scalar_lea.sflag [#allocation7], %s1954
        %s1956 = sand.u32 %s357, 1
        %s1957 = smul.addr %s1956, 32
        %s1958 = scalar_lea.vmem [#allocation6], %s1957
        // Predicated region
        $region77: #{tpu_custom_call.1} parent=71 // pred_check
          %p1959 = pneg %p341
        $region78: #{tpu_custom_call.1} parent=71 // pred_check_branch
          %1961 = sbr.rel (%p1959) target = $region80
        $region79: #{tpu_custom_call.1} parent=71 // pred_region
          %s1963 = ssub.s32 128, 128
          %1964 = vsyncadd %s1950, %s1963
          %s1965 = smul.addr %s35, 128
          %s1966 = scalar_lea.hbm %s13, %s1965
          %s1968 = sshll.u32 %s1953, 4
          %s1969 = int_to_ptr.vmem [resolvable:$true] %s1968
          %1971 = dma.vmem_to_hbm [thread:$0]  %s1969, 128, %s1966, %s1950
        $region80: #{tpu_custom_call.1} parent=71 // pred_fallthru
          _
        // Predicated region
        $region81: #{tpu_custom_call.1} parent=71 // pred_check
          %p1972 = pneg %p367
        $region82: #{tpu_custom_call.1} parent=71 // pred_check_branch
          %1974 = sbr.rel (%p1972) target = $region84
        $region83: #{tpu_custom_call.1} parent=71 // pred_region
          %s1976 = ssub.s32 512, 512
          %1977 = vsyncadd %s1955, %s1976
          %s1978 = smul.addr %s35, 4
          %s1979 = smul.addr %s1978, 128
          %s1980 = scalar_lea.hbm %s14, %s1979
          %s1981 = sshll.u32 %s1958, 4
          %s1982 = int_to_ptr.vmem [resolvable:$true] %s1981
          %1987 = dma.vmem_to_hbm [thread:$0]  %s1982, 512, %s1980, %s1955, 128, 128, 8
        $region84: #{tpu_custom_call.1} parent=71 // pred_fallthru
          _
      $region72: #{tpu_custom_call.1} parent=5 // pred_fallthru
        _
      %p1988 = scmp.le.s32.totalorder 2, %s30
      // Predicated region
      $region85: #{tpu_custom_call.1} parent=5 // pred_check
        %p1989 = pneg %p1988
      $region86: #{tpu_custom_call.1} parent=5 // pred_check_branch
        %1991 = sbr.rel (%p1989) target = $region88
      $region87: #{tpu_custom_call.1} parent=5 // pred_region
        %s1992 = ssub.s32 %s30, 2
        // Predicated region
        $region89: #{tpu_custom_call.1} parent=87 // pred_check
          %p1993 = pneg %p347
        $region90: #{tpu_custom_call.1} parent=87 // pred_check_branch
          %1995 = sbr.rel (%p1993) target = $region92
        $region91: #{tpu_custom_call.1} parent=87 // pred_region
          %s1996 = sand.u32 %s332, 1
          %s1997 = scalar_lea.sflag [#allocation4], %s1996
          %s1998 = sand.u32 %s332, 1
          %s1999 = smul.addr %s1998, 8
          %s2000 = scalar_lea.vmem [#allocation5], %s1999
          %2001 = dma.done %s1997, 128
        $region92: #{tpu_custom_call.1} parent=87 // pred_fallthru
          _
        // Predicated region
        $region93: #{tpu_custom_call.1} parent=87 // pred_check
          %p2002 = pneg %p373
        $region94: #{tpu_custom_call.1} parent=87 // pred_check_branch
          %2004 = sbr.rel (%p2002) target = $region96
        $region95: #{tpu_custom_call.1} parent=87 // pred_region
          %s2005 = sand.u32 %s358, 1
          %s2006 = scalar_lea.sflag [#allocation7], %s2005
          %s2007 = sand.u32 %s358, 1
          %s2008 = smul.addr %s2007, 32
          %s2009 = scalar_lea.vmem [#allocation6], %s2008
          %2010 = dma.done %s2006, 512
        $region96: #{tpu_custom_call.1} parent=87 // pred_fallthru
          _
      $region88: #{tpu_custom_call.1} parent=5 // pred_fallthru
        _
    $region6: #{tpu_custom_call.1} parent=1 // loop_footer
      %s34 = sadd.s32 1, %s30
    $region7: #{tpu_custom_call.1} parent=1 // loop_footer_branch
      %29 = sbr.rel target = $region3
    $region8: #{tpu_custom_call.1} parent=1 // loop_exit
      _
    %2011 = vsyncpa [#allocation3], 1
    %s2012 = scalar_lea.sflag [#allocation3], 1
    %2013 = vsyncpa %s2012, 1
    %2014 = vsyncpa [#allocation4], 1
    %s2015 = scalar_lea.sflag [#allocation4], 1
    %2016 = vsyncpa %s2015, 1
    %2017 = vsyncpa [#allocation7], 1
    %s2018 = scalar_lea.sflag [#allocation7], 1
    %2019 = vsyncpa %s2018, 1

</llo_original>
